<compile_context>
chip_gen: v7x
topology: tpu7x:2x2x1
jax: 0.10.0
libtpu: 0.0.40
codegen_flags: <defaults>
</compile_context>

<pallas_src>
import jax
import jax.numpy as jnp
from jax import lax
from jax.experimental import pallas as pl
from jax.experimental.pallas import tpu as pltpu


def bilstm_kernel(embeds_ref,   # (T*B, E) f32   time-major flattened embeddings
                  w_ih_f_ref,   # (E, 4H)        forward-dir input weights (pre-transposed)
                  w_hh_f_ref,   # (H, 4H)        forward-dir hidden weights
                  b_f_ref,      # (1, 4H)        forward-dir bias (b_ih + b_hh)
                  w_ih_b_ref,   # (E, 4H)        backward-dir input weights
                  b_b_ref,      # (1, 4H)        backward-dir bias
                  w_fc_ref,     # (2H, O)        fc weight (pre-transposed)
                  b_fc_ref,     # (1, O)
                  logits_ref):  # (B, O)         output
    TB, E = embeds_ref.shape
    B = logits_ref.shape[0]
    T = TB // B
    H = w_hh_f_ref.shape[0]

    def gates_to_hc(gates, c):
        # PyTorch gate order: [i, f, g, o]
        i = jax.nn.sigmoid(gates[:, 0 * H:1 * H])
        f = jax.nn.sigmoid(gates[:, 1 * H:2 * H])
        g = jnp.tanh(gates[:, 2 * H:3 * H])
        o = jax.nn.sigmoid(gates[:, 3 * H:4 * H])
        c_new = f * c + i * g
        h_new = o * jnp.tanh(c_new)
        return h_new, c_new

    # --- Hoisted input projection (pre-gates): one big matmul, bias folded in,
    # --- computed once outside the serial recurrence.
    pregates = (jnp.dot(embeds_ref[...], w_ih_f_ref[...],
                        preferred_element_type=jnp.float32)
                + b_f_ref[...])                                   # (T*B, 4H)

    zeros = jnp.zeros((B, H), jnp.float32)

    # --- Forward recurrence: fully unrolled (T static & small).  Only the
    # --- small (B,H) x (H,4H) matmul + gate math remain on the serial path.
    # TODO(synk): for long sequences switch to lax.fori_loop(unroll=k) with the
    # pre-gates kept in a VMEM scratch (or streamed over a T grid axis).
    h, c = zeros, zeros
    for t in range(T):
        gates = (pregates[t * B:(t + 1) * B, :]
                 + jnp.dot(h, w_hh_f_ref[...],
                           preferred_element_type=jnp.float32))
        h, c = gates_to_hc(gates, c)
    h_f = h                                                       # (B, H)

    # --- Backward direction: for predictionType=True only hb at original time
    # --- index T-1 is consumed, which is exactly the FIRST backward step from
    # --- zero state on x[T-1]; h0 = 0 so the W_hh_b term vanishes entirely.
    gates_b = (jnp.dot(embeds_ref[(T - 1) * B:T * B, :], w_ih_b_ref[...],
                       preferred_element_type=jnp.float32)
               + b_b_ref[...])
    h_b, _ = gates_to_hc(gates_b, zeros)                          # (B, H)

    # --- fc on concat(h_f, h_b): split the fc weight rows instead of doing a
    # --- lane-concat of activations.
    logits_ref[...] = (
        jnp.dot(h_f, w_fc_ref[0:H, :], preferred_element_type=jnp.float32)
        + jnp.dot(h_b, w_fc_ref[H:2 * H, :], preferred_element_type=jnp.float32)
        + b_fc_ref[...])


def bilstm_forward(tokens, params):
    """tokens: (B, T) int32. Returns logits (B, num_outcomes) float32."""
    emb = params["embedding"][tokens]                    # (B, T, E) gather (glue)
    B, T = tokens.shape
    E = emb.shape[-1]
    H = params["w_hh_f"].shape[0]
    O = params["w_fc"].shape[1]

    # time-major, flattened: row index = t * B + b
    embeds_flat = (jnp.transpose(emb, (1, 0, 2))
                   .reshape(T * B, E)
                   .astype(jnp.float32))

    flops = (2 * T * B * E * 4 * H        # hoisted input projection (fwd)
             + 2 * T * B * H * 4 * H      # recurrent hidden matmuls
             + 2 * B * E * 4 * H          # single backward step
             + 2 * B * 2 * H * O)         # fc
    transcendentals = 5 * B * H * (T + 1)
    bytes_accessed = 4 * (T * B * E + 2 * E * 4 * H + H * 4 * H
                          + 2 * 4 * H + 2 * H * O + O + B * O)

    vmem = pl.BlockSpec(memory_space=pltpu.MemorySpace.VMEM)
    return pl.pallas_call(
        bilstm_kernel,
        out_shape=jax.ShapeDtypeStruct((B, O), jnp.float32),
        in_specs=[vmem] * 8,
        out_specs=vmem,
        cost_estimate=pl.CostEstimate(flops=flops,
                                      transcendentals=transcendentals,
                                      bytes_accessed=bytes_accessed),
    )(embeds_flat,
      params["w_ih_f"], params["w_hh_f"], params["b_f"],
      params["w_ih_b"], params["b_b"],
      params["w_fc"], params["b_fc"])


def reference_forward(tokens, params):
    """Pure-JAX reference with full bidirectional semantics (validation)."""
    emb = params["embedding"][tokens].astype(jnp.float32)   # (B, T, E)
    B, T, E = emb.shape
    H = params["w_hh_f"].shape[0]

    def run_dir(w_ih, w_hh, b, reverse):
        seq = emb[:, ::-1, :] if reverse else emb
        seq = jnp.transpose(seq, (1, 0, 2))                 # (T, B, E)
        h0 = jnp.zeros((B, H), jnp.float32)

        def step(carry, x_t):
            h, c = carry
            gates = x_t @ w_ih + h @ w_hh + b
            i = jax.nn.sigmoid(gates[:, 0 * H:1 * H])
            f = jax.nn.sigmoid(gates[:, 1 * H:2 * H])
            g = jnp.tanh(gates[:, 2 * H:3 * H])
            o = jax.nn.sigmoid(gates[:, 3 * H:4 * H])
            c = f * c + i * g
            h = o * jnp.tanh(c)
            return (h, c), h

        _, hs = lax.scan(step, (h0, h0), seq)               # (T, B, H)
        hs = jnp.transpose(hs, (1, 0, 2))                   # (B, T, H)
        return hs[:, ::-1, :] if reverse else hs

    hf = run_dir(params["w_ih_f"], params["w_hh_f"], params["b_f"], False)
    hb = run_dir(params["w_ih_b"], params["w_hh_b"], params["b_b"], True)
    lstm_out = jnp.concatenate([hf, hb], axis=-1)           # (B, T, 2H)
    last = lstm_out[:, -1, :]
    return last @ params["w_fc"] + params["b_fc"][0]


def init_params(key, vocab_size, embedding_dim, hidden_dim, num_outcomes):
    E, H, O = embedding_dim, hidden_dim, num_outcomes
    ks = jax.random.split(key, 10)
    s = 0.1
    return {
        "embedding": jax.random.normal(ks[0], (vocab_size, E), jnp.float32),
        # pre-transposed: (in_dim, 4H); biases already summed (b_ih + b_hh)
        "w_ih_f": s * jax.random.normal(ks[1], (E, 4 * H), jnp.float32),
        "w_hh_f": s * jax.random.normal(ks[2], (H, 4 * H), jnp.float32),
        "b_f":    s * jax.random.normal(ks[3], (1, 4 * H), jnp.float32),
        "w_ih_b": s * jax.random.normal(ks[4], (E, 4 * H), jnp.float32),
        "w_hh_b": s * jax.random.normal(ks[5], (H, 4 * H), jnp.float32),
        "b_b":    s * jax.random.normal(ks[6], (1, 4 * H), jnp.float32),
        "w_fc":   s * jax.random.normal(ks[7], (2 * H, O), jnp.float32),
        "b_fc":   s * jax.random.normal(ks[8], (1, O), jnp.float32),
    }


if __name__ == "__main__":
    B, T = 2, 8
    VOCAB, E, H, O = 50, 32, 32, 8

    key = jax.random.PRNGKey(0)
    k_tok, k_par = jax.random.split(key)
    tokens = jax.random.randint(k_tok, (B, T), 0, VOCAB, dtype=jnp.int32)
    params = init_params(k_par, VOCAB, E, H, O)

    logits = jax.block_until_ready(bilstm_forward(tokens, params))
    ref = jax.block_until_ready(reference_forward(tokens, params))

    assert logits.shape == (B, O)
    assert jnp.allclose(logits, ref, atol=1e-4, rtol=1e-4), (logits, ref)
    print("KERNEL_OK")
</pallas_src>

<mosaic_0001>
module attributes {stable_mosaic.version = 11 : i64} {
  func.func @bilstm_kernel(%arg0: memref<16x32xf32, #tpu.memory_space<vmem>>, %arg1: memref<32x128xf32, #tpu.memory_space<vmem>>, %arg2: memref<32x128xf32, #tpu.memory_space<vmem>>, %arg3: memref<1x128xf32, #tpu.memory_space<vmem>>, %arg4: memref<32x128xf32, #tpu.memory_space<vmem>>, %arg5: memref<1x128xf32, #tpu.memory_space<vmem>>, %arg6: memref<64x8xf32, #tpu.memory_space<vmem>>, %arg7: memref<1x8xf32, #tpu.memory_space<vmem>>, %arg8: memref<2x8xf32, #tpu.memory_space<vmem>>) attributes {dimension_semantics = [], scalar_prefetch = 0 : i64, scratch_operands = 0 : i64, tpu.core_type = #tpu.core_type<tc>} {
    %c0 = arith.constant 0 : index
    %c0_0 = arith.constant 0 : index
    %0 = vector.load %arg0[%c0, %c0_0] : memref<16x32xf32, #tpu.memory_space<vmem>>, vector<16x32xf32>
    %c0_1 = arith.constant 0 : index
    %c0_2 = arith.constant 0 : index
    %1 = vector.load %arg1[%c0_1, %c0_2] : memref<32x128xf32, #tpu.memory_space<vmem>>, vector<32x128xf32>
    %cst = arith.constant dense<0.000000e+00> : vector<16x128xf32>
    %2 = tpu.matmul %0, %1, %cst {dimension_numbers = #tpu.dot_dimension_numbers<[1], [0], [0], [1], [0, 0, 1, 1], [], []>} : vector<16x32xf32>, vector<32x128xf32>, vector<16x128xf32> -> vector<16x128xf32>
    %c0_3 = arith.constant 0 : index
    %c0_4 = arith.constant 0 : index
    %3 = vector.load %arg3[%c0_3, %c0_4] : memref<1x128xf32, #tpu.memory_space<vmem>>, vector<1x128xf32>
    %4 = vector.broadcast %3 : vector<1x128xf32> to vector<16x128xf32>
    %5 = arith.addf %2, %4 : vector<16x128xf32>
    %cst_5 = arith.constant 0.000000e+00 : f32
    %6 = vector.broadcast %cst_5 : f32 to vector<2x32xf32>
    %7 = vector.extract_strided_slice %5 {offsets = [0, 0], sizes = [2, 128], strides = [1, 1]} : vector<16x128xf32> to vector<2x128xf32>
    %c0_6 = arith.constant 0 : index
    %c0_7 = arith.constant 0 : index
    %8 = vector.load %arg2[%c0_6, %c0_7] : memref<32x128xf32, #tpu.memory_space<vmem>>, vector<32x128xf32>
    %cst_8 = arith.constant dense<0.000000e+00> : vector<2x128xf32>
    %9 = tpu.matmul %6, %8, %cst_8 {dimension_numbers = #tpu.dot_dimension_numbers<[1], [0], [0], [1], [0, 0, 1, 1], [], []>} : vector<2x32xf32>, vector<32x128xf32>, vector<2x128xf32> -> vector<2x128xf32>
    %10 = arith.addf %7, %9 : vector<2x128xf32>
    %11 = vector.extract_strided_slice %10 {offsets = [0, 0], sizes = [2, 32], strides = [1, 1]} : vector<2x128xf32> to vector<2x32xf32>
    %12 = arith.negf %11 : vector<2x32xf32>
    %13 = math.exp %12 : vector<2x32xf32>
    %cst_9 = arith.constant 1.000000e+00 : f32
    %14 = vector.broadcast %cst_9 : f32 to vector<2x32xf32>
    %15 = arith.addf %14, %13 : vector<2x32xf32>
    %16 = arith.divf %14, %15 : vector<2x32xf32>
    %17 = vector.extract_strided_slice %10 {offsets = [0, 32], sizes = [2, 32], strides = [1, 1]} : vector<2x128xf32> to vector<2x32xf32>
    %18 = arith.negf %17 : vector<2x32xf32>
    %19 = math.exp %18 : vector<2x32xf32>
    %cst_10 = arith.constant 1.000000e+00 : f32
    %20 = vector.broadcast %cst_10 : f32 to vector<2x32xf32>
    %21 = arith.addf %20, %19 : vector<2x32xf32>
    %22 = arith.divf %20, %21 : vector<2x32xf32>
    %23 = vector.extract_strided_slice %10 {offsets = [0, 64], sizes = [2, 32], strides = [1, 1]} : vector<2x128xf32> to vector<2x32xf32>
    %24 = math.tanh %23 : vector<2x32xf32>
    %25 = vector.extract_strided_slice %10 {offsets = [0, 96], sizes = [2, 32], strides = [1, 1]} : vector<2x128xf32> to vector<2x32xf32>
    %26 = arith.negf %25 : vector<2x32xf32>
    %27 = math.exp %26 : vector<2x32xf32>
    %cst_11 = arith.constant 1.000000e+00 : f32
    %28 = vector.broadcast %cst_11 : f32 to vector<2x32xf32>
    %29 = arith.addf %28, %27 : vector<2x32xf32>
    %30 = arith.divf %28, %29 : vector<2x32xf32>
    %31 = arith.mulf %22, %6 : vector<2x32xf32>
    %32 = arith.mulf %16, %24 : vector<2x32xf32>
    %33 = arith.addf %31, %32 : vector<2x32xf32>
    %34 = math.tanh %33 : vector<2x32xf32>
    %35 = arith.mulf %30, %34 : vector<2x32xf32>
    %36 = vector.extract_strided_slice %5 {offsets = [2, 0], sizes = [2, 128], strides = [1, 1]} : vector<16x128xf32> to vector<2x128xf32>
    %c0_12 = arith.constant 0 : index
    %c0_13 = arith.constant 0 : index
    %37 = vector.load %arg2[%c0_12, %c0_13] : memref<32x128xf32, #tpu.memory_space<vmem>>, vector<32x128xf32>
    %cst_14 = arith.constant dense<0.000000e+00> : vector<2x128xf32>
    %38 = tpu.matmul %35, %37, %cst_14 {dimension_numbers = #tpu.dot_dimension_numbers<[1], [0], [0], [1], [0, 0, 1, 1], [], []>} : vector<2x32xf32>, vector<32x128xf32>, vector<2x128xf32> -> vector<2x128xf32>
    %39 = arith.addf %36, %38 : vector<2x128xf32>
    %40 = vector.extract_strided_slice %39 {offsets = [0, 0], sizes = [2, 32], strides = [1, 1]} : vector<2x128xf32> to vector<2x32xf32>
    %41 = arith.negf %40 : vector<2x32xf32>
    %42 = math.exp %41 : vector<2x32xf32>
    %cst_15 = arith.constant 1.000000e+00 : f32
    %43 = vector.broadcast %cst_15 : f32 to vector<2x32xf32>
    %44 = arith.addf %43, %42 : vector<2x32xf32>
    %45 = arith.divf %43, %44 : vector<2x32xf32>
    %46 = vector.extract_strided_slice %39 {offsets = [0, 32], sizes = [2, 32], strides = [1, 1]} : vector<2x128xf32> to vector<2x32xf32>
    %47 = arith.negf %46 : vector<2x32xf32>
    %48 = math.exp %47 : vector<2x32xf32>
    %cst_16 = arith.constant 1.000000e+00 : f32
    %49 = vector.broadcast %cst_16 : f32 to vector<2x32xf32>
    %50 = arith.addf %49, %48 : vector<2x32xf32>
    %51 = arith.divf %49, %50 : vector<2x32xf32>
    %52 = vector.extract_strided_slice %39 {offsets = [0, 64], sizes = [2, 32], strides = [1, 1]} : vector<2x128xf32> to vector<2x32xf32>
    %53 = math.tanh %52 : vector<2x32xf32>
    %54 = vector.extract_strided_slice %39 {offsets = [0, 96], sizes = [2, 32], strides = [1, 1]} : vector<2x128xf32> to vector<2x32xf32>
    %55 = arith.negf %54 : vector<2x32xf32>
    %56 = math.exp %55 : vector<2x32xf32>
    %cst_17 = arith.constant 1.000000e+00 : f32
    %57 = vector.broadcast %cst_17 : f32 to vector<2x32xf32>
    %58 = arith.addf %57, %56 : vector<2x32xf32>
    %59 = arith.divf %57, %58 : vector<2x32xf32>
    %60 = arith.mulf %51, %33 : vector<2x32xf32>
    %61 = arith.mulf %45, %53 : vector<2x32xf32>
    %62 = arith.addf %60, %61 : vector<2x32xf32>
    %63 = math.tanh %62 : vector<2x32xf32>
    %64 = arith.mulf %59, %63 : vector<2x32xf32>
    %65 = vector.extract_strided_slice %5 {offsets = [4, 0], sizes = [2, 128], strides = [1, 1]} : vector<16x128xf32> to vector<2x128xf32>
    %c0_18 = arith.constant 0 : index
    %c0_19 = arith.constant 0 : index
    %66 = vector.load %arg2[%c0_18, %c0_19] : memref<32x128xf32, #tpu.memory_space<vmem>>, vector<32x128xf32>
    %cst_20 = arith.constant dense<0.000000e+00> : vector<2x128xf32>
    %67 = tpu.matmul %64, %66, %cst_20 {dimension_numbers = #tpu.dot_dimension_numbers<[1], [0], [0], [1], [0, 0, 1, 1], [], []>} : vector<2x32xf32>, vector<32x128xf32>, vector<2x128xf32> -> vector<2x128xf32>
    %68 = arith.addf %65, %67 : vector<2x128xf32>
    %69 = vector.extract_strided_slice %68 {offsets = [0, 0], sizes = [2, 32], strides = [1, 1]} : vector<2x128xf32> to vector<2x32xf32>
    %70 = arith.negf %69 : vector<2x32xf32>
    %71 = math.exp %70 : vector<2x32xf32>
    %cst_21 = arith.constant 1.000000e+00 : f32
    %72 = vector.broadcast %cst_21 : f32 to vector<2x32xf32>
    %73 = arith.addf %72, %71 : vector<2x32xf32>
    %74 = arith.divf %72, %73 : vector<2x32xf32>
    %75 = vector.extract_strided_slice %68 {offsets = [0, 32], sizes = [2, 32], strides = [1, 1]} : vector<2x128xf32> to vector<2x32xf32>
    %76 = arith.negf %75 : vector<2x32xf32>
    %77 = math.exp %76 : vector<2x32xf32>
    %cst_22 = arith.constant 1.000000e+00 : f32
    %78 = vector.broadcast %cst_22 : f32 to vector<2x32xf32>
    %79 = arith.addf %78, %77 : vector<2x32xf32>
    %80 = arith.divf %78, %79 : vector<2x32xf32>
    %81 = vector.extract_strided_slice %68 {offsets = [0, 64], sizes = [2, 32], strides = [1, 1]} : vector<2x128xf32> to vector<2x32xf32>
    %82 = math.tanh %81 : vector<2x32xf32>
    %83 = vector.extract_strided_slice %68 {offsets = [0, 96], sizes = [2, 32], strides = [1, 1]} : vector<2x128xf32> to vector<2x32xf32>
    %84 = arith.negf %83 : vector<2x32xf32>
    %85 = math.exp %84 : vector<2x32xf32>
    %cst_23 = arith.constant 1.000000e+00 : f32
    %86 = vector.broadcast %cst_23 : f32 to vector<2x32xf32>
    %87 = arith.addf %86, %85 : vector<2x32xf32>
    %88 = arith.divf %86, %87 : vector<2x32xf32>
    %89 = arith.mulf %80, %62 : vector<2x32xf32>
    %90 = arith.mulf %74, %82 : vector<2x32xf32>
    %91 = arith.addf %89, %90 : vector<2x32xf32>
    %92 = math.tanh %91 : vector<2x32xf32>
    %93 = arith.mulf %88, %92 : vector<2x32xf32>
    %94 = vector.extract_strided_slice %5 {offsets = [6, 0], sizes = [2, 128], strides = [1, 1]} : vector<16x128xf32> to vector<2x128xf32>
    %c0_24 = arith.constant 0 : index
    %c0_25 = arith.constant 0 : index
    %95 = vector.load %arg2[%c0_24, %c0_25] : memref<32x128xf32, #tpu.memory_space<vmem>>, vector<32x128xf32>
    %cst_26 = arith.constant dense<0.000000e+00> : vector<2x128xf32>
    %96 = tpu.matmul %93, %95, %cst_26 {dimension_numbers = #tpu.dot_dimension_numbers<[1], [0], [0], [1], [0, 0, 1, 1], [], []>} : vector<2x32xf32>, vector<32x128xf32>, vector<2x128xf32> -> vector<2x128xf32>
    %97 = arith.addf %94, %96 : vector<2x128xf32>
    %98 = vector.extract_strided_slice %97 {offsets = [0, 0], sizes = [2, 32], strides = [1, 1]} : vector<2x128xf32> to vector<2x32xf32>
    %99 = arith.negf %98 : vector<2x32xf32>
    %100 = math.exp %99 : vector<2x32xf32>
    %cst_27 = arith.constant 1.000000e+00 : f32
    %101 = vector.broadcast %cst_27 : f32 to vector<2x32xf32>
    %102 = arith.addf %101, %100 : vector<2x32xf32>
    %103 = arith.divf %101, %102 : vector<2x32xf32>
    %104 = vector.extract_strided_slice %97 {offsets = [0, 32], sizes = [2, 32], strides = [1, 1]} : vector<2x128xf32> to vector<2x32xf32>
    %105 = arith.negf %104 : vector<2x32xf32>
    %106 = math.exp %105 : vector<2x32xf32>
    %cst_28 = arith.constant 1.000000e+00 : f32
    %107 = vector.broadcast %cst_28 : f32 to vector<2x32xf32>
    %108 = arith.addf %107, %106 : vector<2x32xf32>
    %109 = arith.divf %107, %108 : vector<2x32xf32>
    %110 = vector.extract_strided_slice %97 {offsets = [0, 64], sizes = [2, 32], strides = [1, 1]} : vector<2x128xf32> to vector<2x32xf32>
    %111 = math.tanh %110 : vector<2x32xf32>
    %112 = vector.extract_strided_slice %97 {offsets = [0, 96], sizes = [2, 32], strides = [1, 1]} : vector<2x128xf32> to vector<2x32xf32>
    %113 = arith.negf %112 : vector<2x32xf32>
    %114 = math.exp %113 : vector<2x32xf32>
    %cst_29 = arith.constant 1.000000e+00 : f32
    %115 = vector.broadcast %cst_29 : f32 to vector<2x32xf32>
    %116 = arith.addf %115, %114 : vector<2x32xf32>
    %117 = arith.divf %115, %116 : vector<2x32xf32>
    %118 = arith.mulf %109, %91 : vector<2x32xf32>
    %119 = arith.mulf %103, %111 : vector<2x32xf32>
    %120 = arith.addf %118, %119 : vector<2x32xf32>
    %121 = math.tanh %120 : vector<2x32xf32>
    %122 = arith.mulf %117, %121 : vector<2x32xf32>
    %123 = vector.extract_strided_slice %5 {offsets = [8, 0], sizes = [2, 128], strides = [1, 1]} : vector<16x128xf32> to vector<2x128xf32>
    %c0_30 = arith.constant 0 : index
    %c0_31 = arith.constant 0 : index
    %124 = vector.load %arg2[%c0_30, %c0_31] : memref<32x128xf32, #tpu.memory_space<vmem>>, vector<32x128xf32>
    %cst_32 = arith.constant dense<0.000000e+00> : vector<2x128xf32>
    %125 = tpu.matmul %122, %124, %cst_32 {dimension_numbers = #tpu.dot_dimension_numbers<[1], [0], [0], [1], [0, 0, 1, 1], [], []>} : vector<2x32xf32>, vector<32x128xf32>, vector<2x128xf32> -> vector<2x128xf32>
    %126 = arith.addf %123, %125 : vector<2x128xf32>
    %127 = vector.extract_strided_slice %126 {offsets = [0, 0], sizes = [2, 32], strides = [1, 1]} : vector<2x128xf32> to vector<2x32xf32>
    %128 = arith.negf %127 : vector<2x32xf32>
    %129 = math.exp %128 : vector<2x32xf32>
    %cst_33 = arith.constant 1.000000e+00 : f32
    %130 = vector.broadcast %cst_33 : f32 to vector<2x32xf32>
    %131 = arith.addf %130, %129 : vector<2x32xf32>
    %132 = arith.divf %130, %131 : vector<2x32xf32>
    %133 = vector.extract_strided_slice %126 {offsets = [0, 32], sizes = [2, 32], strides = [1, 1]} : vector<2x128xf32> to vector<2x32xf32>
    %134 = arith.negf %133 : vector<2x32xf32>
    %135 = math.exp %134 : vector<2x32xf32>
    %cst_34 = arith.constant 1.000000e+00 : f32
    %136 = vector.broadcast %cst_34 : f32 to vector<2x32xf32>
    %137 = arith.addf %136, %135 : vector<2x32xf32>
    %138 = arith.divf %136, %137 : vector<2x32xf32>
    %139 = vector.extract_strided_slice %126 {offsets = [0, 64], sizes = [2, 32], strides = [1, 1]} : vector<2x128xf32> to vector<2x32xf32>
    %140 = math.tanh %139 : vector<2x32xf32>
    %141 = vector.extract_strided_slice %126 {offsets = [0, 96], sizes = [2, 32], strides = [1, 1]} : vector<2x128xf32> to vector<2x32xf32>
    %142 = arith.negf %141 : vector<2x32xf32>
    %143 = math.exp %142 : vector<2x32xf32>
    %cst_35 = arith.constant 1.000000e+00 : f32
    %144 = vector.broadcast %cst_35 : f32 to vector<2x32xf32>
    %145 = arith.addf %144, %143 : vector<2x32xf32>
    %146 = arith.divf %144, %145 : vector<2x32xf32>
    %147 = arith.mulf %138, %120 : vector<2x32xf32>
    %148 = arith.mulf %132, %140 : vector<2x32xf32>
    %149 = arith.addf %147, %148 : vector<2x32xf32>
    %150 = math.tanh %149 : vector<2x32xf32>
    %151 = arith.mulf %146, %150 : vector<2x32xf32>
    %152 = vector.extract_strided_slice %5 {offsets = [10, 0], sizes = [2, 128], strides = [1, 1]} : vector<16x128xf32> to vector<2x128xf32>
    %c0_36 = arith.constant 0 : index
    %c0_37 = arith.constant 0 : index
    %153 = vector.load %arg2[%c0_36, %c0_37] : memref<32x128xf32, #tpu.memory_space<vmem>>, vector<32x128xf32>
    %cst_38 = arith.constant dense<0.000000e+00> : vector<2x128xf32>
    %154 = tpu.matmul %151, %153, %cst_38 {dimension_numbers = #tpu.dot_dimension_numbers<[1], [0], [0], [1], [0, 0, 1, 1], [], []>} : vector<2x32xf32>, vector<32x128xf32>, vector<2x128xf32> -> vector<2x128xf32>
    %155 = arith.addf %152, %154 : vector<2x128xf32>
    %156 = vector.extract_strided_slice %155 {offsets = [0, 0], sizes = [2, 32], strides = [1, 1]} : vector<2x128xf32> to vector<2x32xf32>
    %157 = arith.negf %156 : vector<2x32xf32>
    %158 = math.exp %157 : vector<2x32xf32>
    %cst_39 = arith.constant 1.000000e+00 : f32
    %159 = vector.broadcast %cst_39 : f32 to vector<2x32xf32>
    %160 = arith.addf %159, %158 : vector<2x32xf32>
    %161 = arith.divf %159, %160 : vector<2x32xf32>
    %162 = vector.extract_strided_slice %155 {offsets = [0, 32], sizes = [2, 32], strides = [1, 1]} : vector<2x128xf32> to vector<2x32xf32>
    %163 = arith.negf %162 : vector<2x32xf32>
    %164 = math.exp %163 : vector<2x32xf32>
    %cst_40 = arith.constant 1.000000e+00 : f32
    %165 = vector.broadcast %cst_40 : f32 to vector<2x32xf32>
    %166 = arith.addf %165, %164 : vector<2x32xf32>
    %167 = arith.divf %165, %166 : vector<2x32xf32>
    %168 = vector.extract_strided_slice %155 {offsets = [0, 64], sizes = [2, 32], strides = [1, 1]} : vector<2x128xf32> to vector<2x32xf32>
    %169 = math.tanh %168 : vector<2x32xf32>
    %170 = vector.extract_strided_slice %155 {offsets = [0, 96], sizes = [2, 32], strides = [1, 1]} : vector<2x128xf32> to vector<2x32xf32>
    %171 = arith.negf %170 : vector<2x32xf32>
    %172 = math.exp %171 : vector<2x32xf32>
    %cst_41 = arith.constant 1.000000e+00 : f32
    %173 = vector.broadcast %cst_41 : f32 to vector<2x32xf32>
    %174 = arith.addf %173, %172 : vector<2x32xf32>
    %175 = arith.divf %173, %174 : vector<2x32xf32>
    %176 = arith.mulf %167, %149 : vector<2x32xf32>
    %177 = arith.mulf %161, %169 : vector<2x32xf32>
    %178 = arith.addf %176, %177 : vector<2x32xf32>
    %179 = math.tanh %178 : vector<2x32xf32>
    %180 = arith.mulf %175, %179 : vector<2x32xf32>
    %181 = vector.extract_strided_slice %5 {offsets = [12, 0], sizes = [2, 128], strides = [1, 1]} : vector<16x128xf32> to vector<2x128xf32>
    %c0_42 = arith.constant 0 : index
    %c0_43 = arith.constant 0 : index
    %182 = vector.load %arg2[%c0_42, %c0_43] : memref<32x128xf32, #tpu.memory_space<vmem>>, vector<32x128xf32>
    %cst_44 = arith.constant dense<0.000000e+00> : vector<2x128xf32>
    %183 = tpu.matmul %180, %182, %cst_44 {dimension_numbers = #tpu.dot_dimension_numbers<[1], [0], [0], [1], [0, 0, 1, 1], [], []>} : vector<2x32xf32>, vector<32x128xf32>, vector<2x128xf32> -> vector<2x128xf32>
    %184 = arith.addf %181, %183 : vector<2x128xf32>
    %185 = vector.extract_strided_slice %184 {offsets = [0, 0], sizes = [2, 32], strides = [1, 1]} : vector<2x128xf32> to vector<2x32xf32>
    %186 = arith.negf %185 : vector<2x32xf32>
    %187 = math.exp %186 : vector<2x32xf32>
    %cst_45 = arith.constant 1.000000e+00 : f32
    %188 = vector.broadcast %cst_45 : f32 to vector<2x32xf32>
    %189 = arith.addf %188, %187 : vector<2x32xf32>
    %190 = arith.divf %188, %189 : vector<2x32xf32>
    %191 = vector.extract_strided_slice %184 {offsets = [0, 32], sizes = [2, 32], strides = [1, 1]} : vector<2x128xf32> to vector<2x32xf32>
    %192 = arith.negf %191 : vector<2x32xf32>
    %193 = math.exp %192 : vector<2x32xf32>
    %cst_46 = arith.constant 1.000000e+00 : f32
    %194 = vector.broadcast %cst_46 : f32 to vector<2x32xf32>
    %195 = arith.addf %194, %193 : vector<2x32xf32>
    %196 = arith.divf %194, %195 : vector<2x32xf32>
    %197 = vector.extract_strided_slice %184 {offsets = [0, 64], sizes = [2, 32], strides = [1, 1]} : vector<2x128xf32> to vector<2x32xf32>
    %198 = math.tanh %197 : vector<2x32xf32>
    %199 = vector.extract_strided_slice %184 {offsets = [0, 96], sizes = [2, 32], strides = [1, 1]} : vector<2x128xf32> to vector<2x32xf32>
    %200 = arith.negf %199 : vector<2x32xf32>
    %201 = math.exp %200 : vector<2x32xf32>
    %cst_47 = arith.constant 1.000000e+00 : f32
    %202 = vector.broadcast %cst_47 : f32 to vector<2x32xf32>
    %203 = arith.addf %202, %201 : vector<2x32xf32>
    %204 = arith.divf %202, %203 : vector<2x32xf32>
    %205 = arith.mulf %196, %178 : vector<2x32xf32>
    %206 = arith.mulf %190, %198 : vector<2x32xf32>
    %207 = arith.addf %205, %206 : vector<2x32xf32>
    %208 = math.tanh %207 : vector<2x32xf32>
    %209 = arith.mulf %204, %208 : vector<2x32xf32>
    %210 = vector.extract_strided_slice %5 {offsets = [14, 0], sizes = [2, 128], strides = [1, 1]} : vector<16x128xf32> to vector<2x128xf32>
    %c0_48 = arith.constant 0 : index
    %c0_49 = arith.constant 0 : index
    %211 = vector.load %arg2[%c0_48, %c0_49] : memref<32x128xf32, #tpu.memory_space<vmem>>, vector<32x128xf32>
    %cst_50 = arith.constant dense<0.000000e+00> : vector<2x128xf32>
    %212 = tpu.matmul %209, %211, %cst_50 {dimension_numbers = #tpu.dot_dimension_numbers<[1], [0], [0], [1], [0, 0, 1, 1], [], []>} : vector<2x32xf32>, vector<32x128xf32>, vector<2x128xf32> -> vector<2x128xf32>
    %213 = arith.addf %210, %212 : vector<2x128xf32>
    %214 = vector.extract_strided_slice %213 {offsets = [0, 0], sizes = [2, 32], strides = [1, 1]} : vector<2x128xf32> to vector<2x32xf32>
    %215 = arith.negf %214 : vector<2x32xf32>
    %216 = math.exp %215 : vector<2x32xf32>
    %cst_51 = arith.constant 1.000000e+00 : f32
    %217 = vector.broadcast %cst_51 : f32 to vector<2x32xf32>
    %218 = arith.addf %217, %216 : vector<2x32xf32>
    %219 = arith.divf %217, %218 : vector<2x32xf32>
    %220 = vector.extract_strided_slice %213 {offsets = [0, 32], sizes = [2, 32], strides = [1, 1]} : vector<2x128xf32> to vector<2x32xf32>
    %221 = arith.negf %220 : vector<2x32xf32>
    %222 = math.exp %221 : vector<2x32xf32>
    %cst_52 = arith.constant 1.000000e+00 : f32
    %223 = vector.broadcast %cst_52 : f32 to vector<2x32xf32>
    %224 = arith.addf %223, %222 : vector<2x32xf32>
    %225 = arith.divf %223, %224 : vector<2x32xf32>
    %226 = vector.extract_strided_slice %213 {offsets = [0, 64], sizes = [2, 32], strides = [1, 1]} : vector<2x128xf32> to vector<2x32xf32>
    %227 = math.tanh %226 : vector<2x32xf32>
    %228 = vector.extract_strided_slice %213 {offsets = [0, 96], sizes = [2, 32], strides = [1, 1]} : vector<2x128xf32> to vector<2x32xf32>
    %229 = arith.negf %228 : vector<2x32xf32>
    %230 = math.exp %229 : vector<2x32xf32>
    %cst_53 = arith.constant 1.000000e+00 : f32
    %231 = vector.broadcast %cst_53 : f32 to vector<2x32xf32>
    %232 = arith.addf %231, %230 : vector<2x32xf32>
    %233 = arith.divf %231, %232 : vector<2x32xf32>
    %234 = arith.mulf %225, %207 : vector<2x32xf32>
    %235 = arith.mulf %219, %227 : vector<2x32xf32>
    %236 = arith.addf %234, %235 : vector<2x32xf32>
    %237 = math.tanh %236 : vector<2x32xf32>
    %238 = arith.mulf %233, %237 : vector<2x32xf32>
    %c14 = arith.constant 14 : index
    %c0_54 = arith.constant 0 : index
    %239 = vector.load %arg0[%c14, %c0_54] : memref<16x32xf32, #tpu.memory_space<vmem>>, vector<2x32xf32>
    %c0_55 = arith.constant 0 : index
    %c0_56 = arith.constant 0 : index
    %240 = vector.load %arg4[%c0_55, %c0_56] : memref<32x128xf32, #tpu.memory_space<vmem>>, vector<32x128xf32>
    %cst_57 = arith.constant dense<0.000000e+00> : vector<2x128xf32>
    %241 = tpu.matmul %239, %240, %cst_57 {dimension_numbers = #tpu.dot_dimension_numbers<[1], [0], [0], [1], [0, 0, 1, 1], [], []>} : vector<2x32xf32>, vector<32x128xf32>, vector<2x128xf32> -> vector<2x128xf32>
    %c0_58 = arith.constant 0 : index
    %c0_59 = arith.constant 0 : index
    %242 = vector.load %arg5[%c0_58, %c0_59] : memref<1x128xf32, #tpu.memory_space<vmem>>, vector<1x128xf32>
    %243 = vector.broadcast %242 : vector<1x128xf32> to vector<2x128xf32>
    %244 = arith.addf %241, %243 : vector<2x128xf32>
    %245 = vector.extract_strided_slice %244 {offsets = [0, 0], sizes = [2, 32], strides = [1, 1]} : vector<2x128xf32> to vector<2x32xf32>
    %246 = arith.negf %245 : vector<2x32xf32>
    %247 = math.exp %246 : vector<2x32xf32>
    %cst_60 = arith.constant 1.000000e+00 : f32
    %248 = vector.broadcast %cst_60 : f32 to vector<2x32xf32>
    %249 = arith.addf %248, %247 : vector<2x32xf32>
    %250 = arith.divf %248, %249 : vector<2x32xf32>
    %251 = vector.extract_strided_slice %244 {offsets = [0, 32], sizes = [2, 32], strides = [1, 1]} : vector<2x128xf32> to vector<2x32xf32>
    %252 = arith.negf %251 : vector<2x32xf32>
    %253 = math.exp %252 : vector<2x32xf32>
    %cst_61 = arith.constant 1.000000e+00 : f32
    %254 = vector.broadcast %cst_61 : f32 to vector<2x32xf32>
    %255 = arith.addf %254, %253 : vector<2x32xf32>
    %256 = arith.divf %254, %255 : vector<2x32xf32>
    %257 = vector.extract_strided_slice %244 {offsets = [0, 64], sizes = [2, 32], strides = [1, 1]} : vector<2x128xf32> to vector<2x32xf32>
    %258 = math.tanh %257 : vector<2x32xf32>
    %259 = vector.extract_strided_slice %244 {offsets = [0, 96], sizes = [2, 32], strides = [1, 1]} : vector<2x128xf32> to vector<2x32xf32>
    %260 = arith.negf %259 : vector<2x32xf32>
    %261 = math.exp %260 : vector<2x32xf32>
    %cst_62 = arith.constant 1.000000e+00 : f32
    %262 = vector.broadcast %cst_62 : f32 to vector<2x32xf32>
    %263 = arith.addf %262, %261 : vector<2x32xf32>
    %264 = arith.divf %262, %263 : vector<2x32xf32>
    %265 = arith.mulf %256, %6 : vector<2x32xf32>
    %266 = arith.mulf %250, %258 : vector<2x32xf32>
    %267 = arith.addf %265, %266 : vector<2x32xf32>
    %268 = math.tanh %267 : vector<2x32xf32>
    %269 = arith.mulf %264, %268 : vector<2x32xf32>
    %c0_63 = arith.constant 0 : index
    %c0_64 = arith.constant 0 : index
    %270 = vector.load %arg6[%c0_63, %c0_64] : memref<64x8xf32, #tpu.memory_space<vmem>>, vector<32x8xf32>
    %cst_65 = arith.constant dense<0.000000e+00> : vector<2x8xf32>
    %271 = tpu.matmul %238, %270, %cst_65 {dimension_numbers = #tpu.dot_dimension_numbers<[1], [0], [0], [1], [0, 0, 1, 1], [], []>} : vector<2x32xf32>, vector<32x8xf32>, vector<2x8xf32> -> vector<2x8xf32>
    %c32 = arith.constant 32 : index
    %c0_66 = arith.constant 0 : index
    %272 = vector.load %arg6[%c32, %c0_66] : memref<64x8xf32, #tpu.memory_space<vmem>>, vector<32x8xf32>
    %cst_67 = arith.constant dense<0.000000e+00> : vector<2x8xf32>
    %273 = tpu.matmul %269, %272, %cst_67 {dimension_numbers = #tpu.dot_dimension_numbers<[1], [0], [0], [1], [0, 0, 1, 1], [], []>} : vector<2x32xf32>, vector<32x8xf32>, vector<2x8xf32> -> vector<2x8xf32>
    %274 = arith.addf %271, %273 : vector<2x8xf32>
    %c0_68 = arith.constant 0 : index
    %c0_69 = arith.constant 0 : index
    %275 = vector.load %arg7[%c0_68, %c0_69] : memref<1x8xf32, #tpu.memory_space<vmem>>, vector<1x8xf32>
    %276 = vector.broadcast %275 : vector<1x8xf32> to vector<2x8xf32>
    %277 = arith.addf %274, %276 : vector<2x8xf32>
    %c0_70 = arith.constant 0 : index
    %c0_71 = arith.constant 0 : index
    %278 = vector.load %arg8[%c0_70, %c0_71] : memref<2x8xf32, #tpu.memory_space<vmem>>, vector<2x8xf32>
    tpu.vector_store %arg8[%c0_70, %c0_71], %277 {strides = array<i32>} : memref<2x8xf32, #tpu.memory_space<vmem>>, vector<2x8xf32>,
    return
  }
}

</mosaic_0001>

<llo_original>
// kernel: tpu_custom_call.1
$region0: #{tpu_custom_call.1}
  #allocation0 [shape = 'u32[]', space=smem, size = 0x4, offset = 0x4, fixed_abs, tag = 'smem constant byte address 0x4 - core index']
  #allocation1 [shape = 'u32[144,128]{1,0:T(1,128)}', space=vmem, size = 0x12000, scoped, tag = 'internal scratch']
  %s0 = inlined_call_operand.hbm [shape: f32[16,32], index: 0, kind: input, shape index: {}]
  %s1 = inlined_call_operand.vmem [shape: f32[32,128], index: 1, kind: input, shape index: {}]
  %s2 = inlined_call_operand.vmem [shape: f32[32,128], index: 2, kind: input, shape index: {}]
  %s3 = inlined_call_operand.vmem [shape: f32[1,128], index: 3, kind: input, shape index: {}]
  %s4 = inlined_call_operand.hbm [shape: f32[32,128], index: 4, kind: input, shape index: {}]
  %s5 = inlined_call_operand.vmem [shape: f32[1,128], index: 5, kind: input, shape index: {}]
  %s6 = inlined_call_operand.vmem [shape: f32[64,8], index: 6, kind: input, shape index: {}]
  %s7 = inlined_call_operand.vmem [shape: f32[1,8], index: 7, kind: input, shape index: {}]
  %s8 = inlined_call_operand.hbm [shape: f32[2,8], index: 8, kind: output, shape index: {}]
  %s9 = sld [smem:[#allocation0]]
  $region50: #{tpu_custom_call.1} parent=0
    _
  %s11 = ssub.s32 1, %s9
  %s12 = scalar_select 0, %s11, %s9
  $region1: #{tpu_custom_call.1} parent=0
    #allocation2 [shape = 'u8[8192]{0}', space=vmem, size = 0x2000, scoped, tag = 'input window, operand 0, single buffered']
    #allocation3 [shape = 's32[1]{0}', space=sflag, size = 0x4, scoped, tag = 'scoped memory for tpu_custom_call.1']
    #allocation4 [shape = 's32[1]{0}', space=sflag, size = 0x4, scoped, tag = 'scoped memory for tpu_custom_call.1']
    #allocation5 [shape = 'u8[16384]{0}', space=vmem, size = 0x4000, scoped, tag = 'input window, operand 4, single buffered']
    #allocation6 [shape = 's32[1]{0}', space=sflag, size = 0x4, scoped, tag = 'scoped memory for tpu_custom_call.1']
    #allocation7 [shape = 'u8[1024]{0}', space=vmem, size = 0x400, scoped, tag = 'output window, operand 0, single buffered']
    %13 = vsyncpa [#allocation3], 0
    %14 = vsyncpa [#allocation6], 0
    %15 = vsyncpa [#allocation4], 0
    // Predicated region
    $region2: #{tpu_custom_call.1} parent=1 // pred_check
      _
    $region3: #{tpu_custom_call.1} parent=1 // pred_check_branch
      %17 = sbr.rel (0) target = $region5
    $region4: #{tpu_custom_call.1} parent=1 // pred_region
      %s19 = ssub.s32 256, 256
      %20 = vsyncadd [#allocation3], %s19
      %s21 = sshll.u32 [#allocation2], 4
      %s22 = int_to_ptr.vmem [resolvable:$true] %s21
      %27 = dma.hbm_to_vmem [thread:$0]  %s0, 256, %s22, [#allocation3], 128, 128, 8
    $region5: #{tpu_custom_call.1} parent=1 // pred_fallthru
      _
    // Predicated region
    $region6: #{tpu_custom_call.1} parent=1 // pred_check
      _
    $region7: #{tpu_custom_call.1} parent=1 // pred_check_branch
      %29 = sbr.rel (0) target = $region9
    $region8: #{tpu_custom_call.1} parent=1 // pred_region
      _
    $region9: #{tpu_custom_call.1} parent=1 // pred_fallthru
      _
    // Predicated region
    $region10: #{tpu_custom_call.1} parent=1 // pred_check
      _
    $region11: #{tpu_custom_call.1} parent=1 // pred_check_branch
      %31 = sbr.rel (0) target = $region13
    $region12: #{tpu_custom_call.1} parent=1 // pred_region
      _
    $region13: #{tpu_custom_call.1} parent=1 // pred_fallthru
      _
    // Predicated region
    $region14: #{tpu_custom_call.1} parent=1 // pred_check
      _
    $region15: #{tpu_custom_call.1} parent=1 // pred_check_branch
      %33 = sbr.rel (0) target = $region17
    $region16: #{tpu_custom_call.1} parent=1 // pred_region
      _
    $region17: #{tpu_custom_call.1} parent=1 // pred_fallthru
      _
    // Predicated region
    $region18: #{tpu_custom_call.1} parent=1 // pred_check
      _
    $region19: #{tpu_custom_call.1} parent=1 // pred_check_branch
      %35 = sbr.rel (0) target = $region21
    $region20: #{tpu_custom_call.1} parent=1 // pred_region
      %s37 = ssub.s32 512, 512
      %38 = vsyncadd [#allocation6], %s37
      %s39 = sshll.u32 [#allocation5], 4
      %s40 = int_to_ptr.vmem [resolvable:$true] %s39
      %45 = dma.hbm_to_vmem [thread:$0]  %s4, 512, %s40, [#allocation6], 128, 128, 8
    $region21: #{tpu_custom_call.1} parent=1 // pred_fallthru
      _
    // Predicated region
    $region22: #{tpu_custom_call.1} parent=1 // pred_check
      _
    $region23: #{tpu_custom_call.1} parent=1 // pred_check_branch
      %47 = sbr.rel (0) target = $region25
    $region24: #{tpu_custom_call.1} parent=1 // pred_region
      _
    $region25: #{tpu_custom_call.1} parent=1 // pred_fallthru
      _
    // Predicated region
    $region26: #{tpu_custom_call.1} parent=1 // pred_check
      _
    $region27: #{tpu_custom_call.1} parent=1 // pred_check_branch
      %49 = sbr.rel (0) target = $region29
    $region28: #{tpu_custom_call.1} parent=1 // pred_region
      _
    $region29: #{tpu_custom_call.1} parent=1 // pred_fallthru
      _
    // Predicated region
    $region30: #{tpu_custom_call.1} parent=1 // pred_check
      _
    $region31: #{tpu_custom_call.1} parent=1 // pred_check_branch
      %51 = sbr.rel (0) target = $region33
    $region32: #{tpu_custom_call.1} parent=1 // pred_region
      _
    $region33: #{tpu_custom_call.1} parent=1 // pred_fallthru
      _
    // Predicated region
    $region34: #{tpu_custom_call.1} parent=1 // pred_check
      _
    $region35: #{tpu_custom_call.1} parent=1 // pred_check_branch
      %53 = sbr.rel (0) target = $region37
    $region36: #{tpu_custom_call.1} parent=1 // pred_region
      %54 = dma.done [#allocation3], 256
    $region37: #{tpu_custom_call.1} parent=1 // pred_fallthru
      _
    // Predicated region
    $region38: #{tpu_custom_call.1} parent=1 // pred_check
      _
    $region39: #{tpu_custom_call.1} parent=1 // pred_check_branch
      %56 = sbr.rel (0) target = $region41
    $region40: #{tpu_custom_call.1} parent=1 // pred_region
      %57 = dma.done [#allocation6], 512
    $region41: #{tpu_custom_call.1} parent=1 // pred_fallthru
      _
    %v58 = vld [vmem:[#allocation2] sm:$0xff]
    %v59 = vld [vmem:[#allocation2 + $0x8] sm:$0xff]
    %v60 = vld [vmem:[%s1] sm:$0xff]
    %v61 = vld [vmem:[%s1 + $0x8] sm:$0xff]
    %v62 = vld [vmem:[%s1 + $0x10] sm:$0xff]
    %v63 = vld [vmem:[%s1 + $0x18] sm:$0xff]
    %v64 = vld [vmem:[%s3] sm:$0x1]
    %v66 = vlaneseq
    %v67 = vshrl.u32 %v66, 7
    %v68 = vsub.s32 0, %v67
    %v69 = vrot.slane %v64, %v68
    %vm71 = vcmask 261120
    %v73 = vsel %vm71, %v58, 0
    %v76 = vsel %vm71, %v59, 0
    %78 = vmatprep.subr.mxu0 0.0
    %79 = vmatpush1.msra.mxu0 %v60
    %80 = vmatprep.subr.mxu0 0.0
    %81 = vmatpush1.msra.mxu0 %v61
    %82 = vmatprep.subr.mxu0 0.0
    %83 = vmatpush1.msra.mxu0 %v62
    %84 = vmatprep.subr.mxu0 0.0
    %85 = vmatpush1.msra.mxu0 %v63
    %86 = vmatprep.subr.mxu0 0.0
    %87 = vmatpush1.msra.mxu0 0.0
    %88 = vmatprep.subr.mxu0 0.0
    %89 = vmatpush1.msra.mxu0 0.0
    %90 = vmatprep.subr.mxu0 0.0
    %91 = vmatpush1.msra.mxu0 0.0
    %92 = vmatprep.subr.mxu0 0.0
    %93 = vmatpush1.msra.mxu0 0.0
    %94 = vmatprep.subr.mxu0 0.0
    %95 = vmatpush1.msra.mxu0 0.0
    %96 = vmatprep.subr.mxu0 0.0
    %97 = vmatpush1.msra.mxu0 0.0
    %98 = vmatprep.subr.mxu0 0.0
    %99 = vmatpush1.msra.mxu0 0.0
    %100 = vmatprep.subr.mxu0 0.0
    %101 = vmatpush1.msra.mxu0 0.0
    %102 = vmatprep.subr.mxu0 0.0
    %103 = vmatpush1.msra.mxu0 0.0
    %104 = vmatprep.subr.mxu0 0.0
    %105 = vmatpush1.msra.mxu0 0.0
    %106 = vmatprep.subr.mxu0 0.0
    %107 = vmatpush1.msra.mxu0 0.0
    %108 = vmatprep.subr.mxu0 0.0
    %109 = vmatpush1.msra.mxu0 0.0
    %110 = vmatprep.subr.mxu0 0.0
    %111 = vmatpush1.msra.mxu0 0.0
    %112 = vmatprep.subr.mxu0 0.0
    %113 = vmatpush1.msra.mxu0 0.0
    %114 = vmatprep.subr.mxu0 0.0
    %115 = vmatpush1.msra.mxu0 0.0
    %116 = vmatprep.subr.mxu0 0.0
    %117 = vmatpush1.msra.mxu0 0.0
    %118 = vmatprep.subr.mxu0 0.0
    %119 = vmatpush1.msra.mxu0 0.0
    %120 = vmatprep.subr.mxu0 0.0
    %121 = vmatpush1.msra.mxu0 0.0
    %122 = vmatprep.subr.mxu0 0.0
    %123 = vmatpush1.msra.mxu0 0.0
    %124 = vmatprep.subr.mxu0 0.0
    %125 = vmatpush1.msra.mxu0 0.0
    %126 = vmatprep.subr.mxu0 0.0
    %127 = vmatpush1.msra.mxu0 0.0
    %128 = vmatprep.subr.mxu0 0.0
    %129 = vmatpush1.msra.mxu0 0.0
    %130 = vmatprep.subr.mxu0 0.0
    %131 = vmatpush1.msra.mxu0 0.0
    %132 = vmatprep.subr.mxu0 0.0
    %133 = vmatpush1.msra.mxu0 0.0
    %134 = vmatprep.subr.mxu0 0.0
    %135 = vmatpush1.msra.mxu0 0.0
    %136 = vmatprep.subr.mxu0 0.0
    %137 = vmatpush1.msra.mxu0 0.0
    %138 = vmatprep.subr.mxu0 0.0
    %139 = vmatpush1.msra.mxu0 0.0
    %140 = vmatprep.subr.mxu0 0.0
    %141 = vmatpush1.msra.mxu0 0.0
    %142 = vmatprep.mubr.f32.mxu0 0.0
    %143 = vmatmul.mubr.f32.gmra.mrb[0].mxu0 %v73
    %v144 = vpop.f32.mrb[0].mxu0
    %v145 = vadd.f32 %v69, %v144
    %v146 = vpop.f32.mrb[0].mxu0
    %147 = vmatprep.mubr.f32.mxu0 0.0
    %148 = vmatmul.mubr.f32.gmra.mrb[0].mxu0 %v76
    %v149 = vpop.f32.mrb[0].mxu0
    %v150 = vadd.f32 %v69, %v149
    %v151 = vpop.f32.mrb[0].mxu0
    %152 = vdwg.mxu0
    %v153 = vld [vmem:[%s2] sm:$0xff]
    %v154 = vld [vmem:[%s2 + $0x8] sm:$0xff]
    %v155 = vld [vmem:[%s2 + $0x10] sm:$0xff]
    %v156 = vld [vmem:[%s2 + $0x18] sm:$0xff]
    %v158 = vsel %vm71, 0.0, 0
    %160 = vmatprep.subr.mxu0 0.0
    %161 = vmatpush1.msra.mxu0 %v153
    %162 = vmatprep.subr.mxu0 0.0
    %163 = vmatpush1.msra.mxu0 %v154
    %164 = vmatprep.subr.mxu0 0.0
    %165 = vmatpush1.msra.mxu0 %v155
    %166 = vmatprep.subr.mxu0 0.0
    %167 = vmatpush1.msra.mxu0 %v156
    %168 = vmatprep.subr.mxu0 0.0
    %169 = vmatpush1.msra.mxu0 0.0
    %170 = vmatprep.subr.mxu0 0.0
    %171 = vmatpush1.msra.mxu0 0.0
    %172 = vmatprep.subr.mxu0 0.0
    %173 = vmatpush1.msra.mxu0 0.0
    %174 = vmatprep.subr.mxu0 0.0
    %175 = vmatpush1.msra.mxu0 0.0
    %176 = vmatprep.subr.mxu0 0.0
    %177 = vmatpush1.msra.mxu0 0.0
    %178 = vmatprep.subr.mxu0 0.0
    %179 = vmatpush1.msra.mxu0 0.0
    %180 = vmatprep.subr.mxu0 0.0
    %181 = vmatpush1.msra.mxu0 0.0
    %182 = vmatprep.subr.mxu0 0.0
    %183 = vmatpush1.msra.mxu0 0.0
    %184 = vmatprep.subr.mxu0 0.0
    %185 = vmatpush1.msra.mxu0 0.0
    %186 = vmatprep.subr.mxu0 0.0
    %187 = vmatpush1.msra.mxu0 0.0
    %188 = vmatprep.subr.mxu0 0.0
    %189 = vmatpush1.msra.mxu0 0.0
    %190 = vmatprep.subr.mxu0 0.0
    %191 = vmatpush1.msra.mxu0 0.0
    %192 = vmatprep.subr.mxu0 0.0
    %193 = vmatpush1.msra.mxu0 0.0
    %194 = vmatprep.subr.mxu0 0.0
    %195 = vmatpush1.msra.mxu0 0.0
    %196 = vmatprep.subr.mxu0 0.0
    %197 = vmatpush1.msra.mxu0 0.0
    %198 = vmatprep.subr.mxu0 0.0
    %199 = vmatpush1.msra.mxu0 0.0
    %200 = vmatprep.subr.mxu0 0.0
    %201 = vmatpush1.msra.mxu0 0.0
    %202 = vmatprep.subr.mxu0 0.0
    %203 = vmatpush1.msra.mxu0 0.0
    %204 = vmatprep.subr.mxu0 0.0
    %205 = vmatpush1.msra.mxu0 0.0
    %206 = vmatprep.subr.mxu0 0.0
    %207 = vmatpush1.msra.mxu0 0.0
    %208 = vmatprep.subr.mxu0 0.0
    %209 = vmatpush1.msra.mxu0 0.0
    %210 = vmatprep.subr.mxu0 0.0
    %211 = vmatpush1.msra.mxu0 0.0
    %212 = vmatprep.subr.mxu0 0.0
    %213 = vmatpush1.msra.mxu0 0.0
    %214 = vmatprep.subr.mxu0 0.0
    %215 = vmatpush1.msra.mxu0 0.0
    %216 = vmatprep.subr.mxu0 0.0
    %217 = vmatpush1.msra.mxu0 0.0
    %218 = vmatprep.subr.mxu0 0.0
    %219 = vmatpush1.msra.mxu0 0.0
    %220 = vmatprep.subr.mxu0 0.0
    %221 = vmatpush1.msra.mxu0 0.0
    %222 = vmatprep.subr.mxu0 0.0
    %223 = vmatpush1.msra.mxu0 0.0
    %224 = vmatprep.mubr.f32.mxu0 0.0
    %225 = vmatmul.mubr.f32.gmra.mrb[0].mxu0 %v158
    %v226 = vpop.f32.mrb[0].mxu0
    %v227 = vadd.f32 0.0, %v226
    %v228 = vpop.f32.mrb[0].mxu0
    %229 = vdwg.mxu0
    %v230 = vadd.f32 %v145, %v227
    %v231 = vxor.u32 %v230, 2147483648
    %v232 = vmul.f32 %v231, 1.442695
    %v233 = vpow.pop %v232
    %v234 = vadd.f32 %v233, 1.0
    %v235 = vrcp.pop %v234
    %v236 = vmul.f32 1.0, %v235
    %v237 = vtanh.pop %v230
    %v238 = vmul.f32 %v236, 0.0
    %240 = vrot.lane.b32.xlu0 %v237, 64
    %v241 = vpop.permute.xlu0 %240
    %v243 = vmul.f32 %v236, %v241
    %245 = vrot.lane.b32.xlu0 %v243, 32
    %v246 = vpop.permute.xlu0 %245
    %v248 = vadd.f32 %v238, %v246
    %v249 = vtanh.pop %v248
    %251 = vrot.lane.b32.xlu0 %v249, 64
    %v252 = vpop.permute.xlu0 %251
    %v254 = vmul.f32 %v236, %v252
    %256 = vrot.lane.b32.xlu0 %v254, 32
    %v257 = vpop.permute.xlu0 %256
    %v258 = vsel %vm71, %v257, 0
    %260 = vmatprep.subr.mxu0 0.0
    %261 = vmatpush1.msra.mxu0 %v153
    %262 = vmatprep.subr.mxu0 0.0
    %263 = vmatpush1.msra.mxu0 %v154
    %264 = vmatprep.subr.mxu0 0.0
    %265 = vmatpush1.msra.mxu0 %v155
    %266 = vmatprep.subr.mxu0 0.0
    %267 = vmatpush1.msra.mxu0 %v156
    %268 = vmatprep.subr.mxu0 0.0
    %269 = vmatpush1.msra.mxu0 0.0
    %270 = vmatprep.subr.mxu0 0.0
    %271 = vmatpush1.msra.mxu0 0.0
    %272 = vmatprep.subr.mxu0 0.0
    %273 = vmatpush1.msra.mxu0 0.0
    %274 = vmatprep.subr.mxu0 0.0
    %275 = vmatpush1.msra.mxu0 0.0
    %276 = vmatprep.subr.mxu0 0.0
    %277 = vmatpush1.msra.mxu0 0.0
    %278 = vmatprep.subr.mxu0 0.0
    %279 = vmatpush1.msra.mxu0 0.0
    %280 = vmatprep.subr.mxu0 0.0
    %281 = vmatpush1.msra.mxu0 0.0
    %282 = vmatprep.subr.mxu0 0.0
    %283 = vmatpush1.msra.mxu0 0.0
    %284 = vmatprep.subr.mxu0 0.0
    %285 = vmatpush1.msra.mxu0 0.0
    %286 = vmatprep.subr.mxu0 0.0
    %287 = vmatpush1.msra.mxu0 0.0
    %288 = vmatprep.subr.mxu0 0.0
    %289 = vmatpush1.msra.mxu0 0.0
    %290 = vmatprep.subr.mxu0 0.0
    %291 = vmatpush1.msra.mxu0 0.0
    %292 = vmatprep.subr.mxu0 0.0
    %293 = vmatpush1.msra.mxu0 0.0
    %294 = vmatprep.subr.mxu0 0.0
    %295 = vmatpush1.msra.mxu0 0.0
    %296 = vmatprep.subr.mxu0 0.0
    %297 = vmatpush1.msra.mxu0 0.0
    %298 = vmatprep.subr.mxu0 0.0
    %299 = vmatpush1.msra.mxu0 0.0
    %300 = vmatprep.subr.mxu0 0.0
    %301 = vmatpush1.msra.mxu0 0.0
    %302 = vmatprep.subr.mxu0 0.0
    %303 = vmatpush1.msra.mxu0 0.0
    %304 = vmatprep.subr.mxu0 0.0
    %305 = vmatpush1.msra.mxu0 0.0
    %306 = vmatprep.subr.mxu0 0.0
    %307 = vmatpush1.msra.mxu0 0.0
    %308 = vmatprep.subr.mxu0 0.0
    %309 = vmatpush1.msra.mxu0 0.0
    %310 = vmatprep.subr.mxu0 0.0
    %311 = vmatpush1.msra.mxu0 0.0
    %312 = vmatprep.subr.mxu0 0.0
    %313 = vmatpush1.msra.mxu0 0.0
    %314 = vmatprep.subr.mxu0 0.0
    %315 = vmatpush1.msra.mxu0 0.0
    %316 = vmatprep.subr.mxu0 0.0
    %317 = vmatpush1.msra.mxu0 0.0
    %318 = vmatprep.subr.mxu0 0.0
    %319 = vmatpush1.msra.mxu0 0.0
    %320 = vmatprep.subr.mxu0 0.0
    %321 = vmatpush1.msra.mxu0 0.0
    %322 = vmatprep.subr.mxu0 0.0
    %323 = vmatpush1.msra.mxu0 0.0
    %324 = vmatprep.mubr.f32.mxu0 0.0
    %325 = vmatmul.mubr.f32.gmra.mrb[0].mxu0 %v258
    %v326 = vpop.f32.mrb[0].mxu0
    %v327 = vadd.f32 0.0, %v326
    %v328 = vpop.f32.mrb[0].mxu0
    %329 = vdwg.mxu0
    %v331 = vrot.slane %v327, 6
    %v333 = vadd.f32 %v145, %v331
    %v334 = vxor.u32 %v333, 2147483648
    %v335 = vmul.f32 %v334, 1.442695
    %v336 = vpow.pop %v335
    %v337 = vadd.f32 %v336, 1.0
    %v338 = vrcp.pop %v337
    %v339 = vmul.f32 1.0, %v338
    %v340 = vtanh.pop %v333
    %v342 = vrot.slane %v248, 6
    %v344 = vmul.f32 %v339, %v342
    %346 = vrot.lane.b32.xlu0 %v340, 64
    %v347 = vpop.permute.xlu0 %346
    %v349 = vmul.f32 %v339, %v347
    %351 = vrot.lane.b32.xlu0 %v349, 32
    %v352 = vpop.permute.xlu0 %351
    %v354 = vadd.f32 %v344, %v352
    %v355 = vtanh.pop %v354
    %357 = vrot.lane.b32.xlu0 %v355, 64
    %v358 = vpop.permute.xlu0 %357
    %v360 = vmul.f32 %v339, %v358
    %v362 = vrot.slane %v360, 2
    %363 = vrot.lane.b32.xlu0 %v362, 32
    %v364 = vpop.permute.xlu0 %363
    %v365 = vsel %vm71, %v364, 0
    %367 = vmatprep.subr.mxu0 0.0
    %368 = vmatpush1.msra.mxu0 %v153
    %369 = vmatprep.subr.mxu0 0.0
    %370 = vmatpush1.msra.mxu0 %v154
    %371 = vmatprep.subr.mxu0 0.0
    %372 = vmatpush1.msra.mxu0 %v155
    %373 = vmatprep.subr.mxu0 0.0
    %374 = vmatpush1.msra.mxu0 %v156
    %375 = vmatprep.subr.mxu0 0.0
    %376 = vmatpush1.msra.mxu0 0.0
    %377 = vmatprep.subr.mxu0 0.0
    %378 = vmatpush1.msra.mxu0 0.0
    %379 = vmatprep.subr.mxu0 0.0
    %380 = vmatpush1.msra.mxu0 0.0
    %381 = vmatprep.subr.mxu0 0.0
    %382 = vmatpush1.msra.mxu0 0.0
    %383 = vmatprep.subr.mxu0 0.0
    %384 = vmatpush1.msra.mxu0 0.0
    %385 = vmatprep.subr.mxu0 0.0
    %386 = vmatpush1.msra.mxu0 0.0
    %387 = vmatprep.subr.mxu0 0.0
    %388 = vmatpush1.msra.mxu0 0.0
    %389 = vmatprep.subr.mxu0 0.0
    %390 = vmatpush1.msra.mxu0 0.0
    %391 = vmatprep.subr.mxu0 0.0
    %392 = vmatpush1.msra.mxu0 0.0
    %393 = vmatprep.subr.mxu0 0.0
    %394 = vmatpush1.msra.mxu0 0.0
    %395 = vmatprep.subr.mxu0 0.0
    %396 = vmatpush1.msra.mxu0 0.0
    %397 = vmatprep.subr.mxu0 0.0
    %398 = vmatpush1.msra.mxu0 0.0
    %399 = vmatprep.subr.mxu0 0.0
    %400 = vmatpush1.msra.mxu0 0.0
    %401 = vmatprep.subr.mxu0 0.0
    %402 = vmatpush1.msra.mxu0 0.0
    %403 = vmatprep.subr.mxu0 0.0
    %404 = vmatpush1.msra.mxu0 0.0
    %405 = vmatprep.subr.mxu0 0.0
    %406 = vmatpush1.msra.mxu0 0.0
    %407 = vmatprep.subr.mxu0 0.0
    %408 = vmatpush1.msra.mxu0 0.0
    %409 = vmatprep.subr.mxu0 0.0
    %410 = vmatpush1.msra.mxu0 0.0
    %411 = vmatprep.subr.mxu0 0.0
    %412 = vmatpush1.msra.mxu0 0.0
    %413 = vmatprep.subr.mxu0 0.0
    %414 = vmatpush1.msra.mxu0 0.0
    %415 = vmatprep.subr.mxu0 0.0
    %416 = vmatpush1.msra.mxu0 0.0
    %417 = vmatprep.subr.mxu0 0.0
    %418 = vmatpush1.msra.mxu0 0.0
    %419 = vmatprep.subr.mxu0 0.0
    %420 = vmatpush1.msra.mxu0 0.0
    %421 = vmatprep.subr.mxu0 0.0
    %422 = vmatpush1.msra.mxu0 0.0
    %423 = vmatprep.subr.mxu0 0.0
    %424 = vmatpush1.msra.mxu0 0.0
    %425 = vmatprep.subr.mxu0 0.0
    %426 = vmatpush1.msra.mxu0 0.0
    %427 = vmatprep.subr.mxu0 0.0
    %428 = vmatpush1.msra.mxu0 0.0
    %429 = vmatprep.subr.mxu0 0.0
    %430 = vmatpush1.msra.mxu0 0.0
    %431 = vmatprep.mubr.f32.mxu0 0.0
    %432 = vmatmul.mubr.f32.gmra.mrb[0].mxu0 %v365
    %v433 = vpop.f32.mrb[0].mxu0
    %v434 = vadd.f32 0.0, %v433
    %v435 = vpop.f32.mrb[0].mxu0
    %436 = vdwg.mxu0
    %v438 = vrot.slane %v434, 4
    %v440 = vadd.f32 %v145, %v438
    %v441 = vxor.u32 %v440, 2147483648
    %v442 = vmul.f32 %v441, 1.442695
    %v443 = vpow.pop %v442
    %v444 = vadd.f32 %v443, 1.0
    %v445 = vrcp.pop %v444
    %v446 = vmul.f32 1.0, %v445
    %v447 = vtanh.pop %v440
    %v449 = vrot.slane %v354, 6
    %v451 = vmul.f32 %v446, %v449
    %453 = vrot.lane.b32.xlu0 %v447, 64
    %v454 = vpop.permute.xlu0 %453
    %v456 = vmul.f32 %v446, %v454
    %458 = vrot.lane.b32.xlu0 %v456, 32
    %v459 = vpop.permute.xlu0 %458
    %v461 = vadd.f32 %v451, %v459
    %v462 = vtanh.pop %v461
    %464 = vrot.lane.b32.xlu0 %v462, 64
    %v465 = vpop.permute.xlu0 %464
    %v467 = vmul.f32 %v446, %v465
    %v469 = vrot.slane %v467, 4
    %470 = vrot.lane.b32.xlu0 %v469, 32
    %v471 = vpop.permute.xlu0 %470
    %v472 = vsel %vm71, %v471, 0
    %474 = vmatprep.subr.mxu0 0.0
    %475 = vmatpush1.msra.mxu0 %v153
    %476 = vmatprep.subr.mxu0 0.0
    %477 = vmatpush1.msra.mxu0 %v154
    %478 = vmatprep.subr.mxu0 0.0
    %479 = vmatpush1.msra.mxu0 %v155
    %480 = vmatprep.subr.mxu0 0.0
    %481 = vmatpush1.msra.mxu0 %v156
    %482 = vmatprep.subr.mxu0 0.0
    %483 = vmatpush1.msra.mxu0 0.0
    %484 = vmatprep.subr.mxu0 0.0
    %485 = vmatpush1.msra.mxu0 0.0
    %486 = vmatprep.subr.mxu0 0.0
    %487 = vmatpush1.msra.mxu0 0.0
    %488 = vmatprep.subr.mxu0 0.0
    %489 = vmatpush1.msra.mxu0 0.0
    %490 = vmatprep.subr.mxu0 0.0
    %491 = vmatpush1.msra.mxu0 0.0
    %492 = vmatprep.subr.mxu0 0.0
    %493 = vmatpush1.msra.mxu0 0.0
    %494 = vmatprep.subr.mxu0 0.0
    %495 = vmatpush1.msra.mxu0 0.0
    %496 = vmatprep.subr.mxu0 0.0
    %497 = vmatpush1.msra.mxu0 0.0
    %498 = vmatprep.subr.mxu0 0.0
    %499 = vmatpush1.msra.mxu0 0.0
    %500 = vmatprep.subr.mxu0 0.0
    %501 = vmatpush1.msra.mxu0 0.0
    %502 = vmatprep.subr.mxu0 0.0
    %503 = vmatpush1.msra.mxu0 0.0
    %504 = vmatprep.subr.mxu0 0.0
    %505 = vmatpush1.msra.mxu0 0.0
    %506 = vmatprep.subr.mxu0 0.0
    %507 = vmatpush1.msra.mxu0 0.0
    %508 = vmatprep.subr.mxu0 0.0
    %509 = vmatpush1.msra.mxu0 0.0
    %510 = vmatprep.subr.mxu0 0.0
    %511 = vmatpush1.msra.mxu0 0.0
    %512 = vmatprep.subr.mxu0 0.0
    %513 = vmatpush1.msra.mxu0 0.0
    %514 = vmatprep.subr.mxu0 0.0
    %515 = vmatpush1.msra.mxu0 0.0
    %516 = vmatprep.subr.mxu0 0.0
    %517 = vmatpush1.msra.mxu0 0.0
    %518 = vmatprep.subr.mxu0 0.0
    %519 = vmatpush1.msra.mxu0 0.0
    %520 = vmatprep.subr.mxu0 0.0
    %521 = vmatpush1.msra.mxu0 0.0
    %522 = vmatprep.subr.mxu0 0.0
    %523 = vmatpush1.msra.mxu0 0.0
    %524 = vmatprep.subr.mxu0 0.0
    %525 = vmatpush1.msra.mxu0 0.0
    %526 = vmatprep.subr.mxu0 0.0
    %527 = vmatpush1.msra.mxu0 0.0
    %528 = vmatprep.subr.mxu0 0.0
    %529 = vmatpush1.msra.mxu0 0.0
    %530 = vmatprep.subr.mxu0 0.0
    %531 = vmatpush1.msra.mxu0 0.0
    %532 = vmatprep.subr.mxu0 0.0
    %533 = vmatpush1.msra.mxu0 0.0
    %534 = vmatprep.subr.mxu0 0.0
    %535 = vmatpush1.msra.mxu0 0.0
    %536 = vmatprep.subr.mxu0 0.0
    %537 = vmatpush1.msra.mxu0 0.0
    %538 = vmatprep.mubr.f32.mxu0 0.0
    %539 = vmatmul.mubr.f32.gmra.mrb[0].mxu0 %v472
    %v540 = vpop.f32.mrb[0].mxu0
    %v541 = vadd.f32 0.0, %v540
    %v542 = vpop.f32.mrb[0].mxu0
    %543 = vdwg.mxu0
    %v545 = vrot.slane %v541, 2
    %v547 = vadd.f32 %v145, %v545
    %v548 = vxor.u32 %v547, 2147483648
    %v549 = vmul.f32 %v548, 1.442695
    %v550 = vpow.pop %v549
    %v551 = vadd.f32 %v550, 1.0
    %v552 = vrcp.pop %v551
    %v553 = vmul.f32 1.0, %v552
    %v554 = vtanh.pop %v547
    %v556 = vrot.slane %v461, 6
    %v558 = vmul.f32 %v553, %v556
    %560 = vrot.lane.b32.xlu0 %v554, 64
    %v561 = vpop.permute.xlu0 %560
    %v563 = vmul.f32 %v553, %v561
    %565 = vrot.lane.b32.xlu0 %v563, 32
    %v566 = vpop.permute.xlu0 %565
    %v568 = vadd.f32 %v558, %v566
    %v569 = vtanh.pop %v568
    %571 = vrot.lane.b32.xlu0 %v569, 64
    %v572 = vpop.permute.xlu0 %571
    %v574 = vmul.f32 %v553, %v572
    %v576 = vrot.slane %v574, 6
    %577 = vrot.lane.b32.xlu0 %v576, 32
    %v578 = vpop.permute.xlu0 %577
    %v579 = vsel %vm71, %v578, 0
    %581 = vmatprep.subr.mxu0 0.0
    %582 = vmatpush1.msra.mxu0 %v153
    %583 = vmatprep.subr.mxu0 0.0
    %584 = vmatpush1.msra.mxu0 %v154
    %585 = vmatprep.subr.mxu0 0.0
    %586 = vmatpush1.msra.mxu0 %v155
    %587 = vmatprep.subr.mxu0 0.0
    %588 = vmatpush1.msra.mxu0 %v156
    %589 = vmatprep.subr.mxu0 0.0
    %590 = vmatpush1.msra.mxu0 0.0
    %591 = vmatprep.subr.mxu0 0.0
    %592 = vmatpush1.msra.mxu0 0.0
    %593 = vmatprep.subr.mxu0 0.0
    %594 = vmatpush1.msra.mxu0 0.0
    %595 = vmatprep.subr.mxu0 0.0
    %596 = vmatpush1.msra.mxu0 0.0
    %597 = vmatprep.subr.mxu0 0.0
    %598 = vmatpush1.msra.mxu0 0.0
    %599 = vmatprep.subr.mxu0 0.0
    %600 = vmatpush1.msra.mxu0 0.0
    %601 = vmatprep.subr.mxu0 0.0
    %602 = vmatpush1.msra.mxu0 0.0
    %603 = vmatprep.subr.mxu0 0.0
    %604 = vmatpush1.msra.mxu0 0.0
    %605 = vmatprep.subr.mxu0 0.0
    %606 = vmatpush1.msra.mxu0 0.0
    %607 = vmatprep.subr.mxu0 0.0
    %608 = vmatpush1.msra.mxu0 0.0
    %609 = vmatprep.subr.mxu0 0.0
    %610 = vmatpush1.msra.mxu0 0.0
    %611 = vmatprep.subr.mxu0 0.0
    %612 = vmatpush1.msra.mxu0 0.0
    %613 = vmatprep.subr.mxu0 0.0
    %614 = vmatpush1.msra.mxu0 0.0
    %615 = vmatprep.subr.mxu0 0.0
    %616 = vmatpush1.msra.mxu0 0.0
    %617 = vmatprep.subr.mxu0 0.0
    %618 = vmatpush1.msra.mxu0 0.0
    %619 = vmatprep.subr.mxu0 0.0
    %620 = vmatpush1.msra.mxu0 0.0
    %621 = vmatprep.subr.mxu0 0.0
    %622 = vmatpush1.msra.mxu0 0.0
    %623 = vmatprep.subr.mxu0 0.0
    %624 = vmatpush1.msra.mxu0 0.0
    %625 = vmatprep.subr.mxu0 0.0
    %626 = vmatpush1.msra.mxu0 0.0
    %627 = vmatprep.subr.mxu0 0.0
    %628 = vmatpush1.msra.mxu0 0.0
    %629 = vmatprep.subr.mxu0 0.0
    %630 = vmatpush1.msra.mxu0 0.0
    %631 = vmatprep.subr.mxu0 0.0
    %632 = vmatpush1.msra.mxu0 0.0
    %633 = vmatprep.subr.mxu0 0.0
    %634 = vmatpush1.msra.mxu0 0.0
    %635 = vmatprep.subr.mxu0 0.0
    %636 = vmatpush1.msra.mxu0 0.0
    %637 = vmatprep.subr.mxu0 0.0
    %638 = vmatpush1.msra.mxu0 0.0
    %639 = vmatprep.subr.mxu0 0.0
    %640 = vmatpush1.msra.mxu0 0.0
    %641 = vmatprep.subr.mxu0 0.0
    %642 = vmatpush1.msra.mxu0 0.0
    %643 = vmatprep.subr.mxu0 0.0
    %644 = vmatpush1.msra.mxu0 0.0
    %645 = vmatprep.mubr.f32.mxu0 0.0
    %646 = vmatmul.mubr.f32.gmra.mrb[0].mxu0 %v579
    %v647 = vpop.f32.mrb[0].mxu0
    %v648 = vadd.f32 0.0, %v647
    %v649 = vpop.f32.mrb[0].mxu0
    %650 = vdwg.mxu0
    %v651 = vadd.f32 %v150, %v648
    %v652 = vxor.u32 %v651, 2147483648
    %v653 = vmul.f32 %v652, 1.442695
    %v654 = vpow.pop %v653
    %v655 = vadd.f32 %v654, 1.0
    %v656 = vrcp.pop %v655
    %v657 = vmul.f32 1.0, %v656
    %v658 = vtanh.pop %v651
    %v660 = vrot.slane %v568, 6
    %v662 = vmul.f32 %v657, %v660
    %664 = vrot.lane.b32.xlu0 %v658, 64
    %v665 = vpop.permute.xlu0 %664
    %v667 = vmul.f32 %v657, %v665
    %669 = vrot.lane.b32.xlu0 %v667, 32
    %v670 = vpop.permute.xlu0 %669
    %v672 = vadd.f32 %v662, %v670
    %v673 = vtanh.pop %v672
    %675 = vrot.lane.b32.xlu0 %v673, 64
    %v676 = vpop.permute.xlu0 %675
    %v678 = vmul.f32 %v657, %v676
    %680 = vrot.lane.b32.xlu0 %v678, 32
    %v681 = vpop.permute.xlu0 %680
    %v682 = vsel %vm71, %v681, 0
    %684 = vmatprep.subr.mxu0 0.0
    %685 = vmatpush1.msra.mxu0 %v153
    %686 = vmatprep.subr.mxu0 0.0
    %687 = vmatpush1.msra.mxu0 %v154
    %688 = vmatprep.subr.mxu0 0.0
    %689 = vmatpush1.msra.mxu0 %v155
    %690 = vmatprep.subr.mxu0 0.0
    %691 = vmatpush1.msra.mxu0 %v156
    %692 = vmatprep.subr.mxu0 0.0
    %693 = vmatpush1.msra.mxu0 0.0
    %694 = vmatprep.subr.mxu0 0.0
    %695 = vmatpush1.msra.mxu0 0.0
    %696 = vmatprep.subr.mxu0 0.0
    %697 = vmatpush1.msra.mxu0 0.0
    %698 = vmatprep.subr.mxu0 0.0
    %699 = vmatpush1.msra.mxu0 0.0
    %700 = vmatprep.subr.mxu0 0.0
    %701 = vmatpush1.msra.mxu0 0.0
    %702 = vmatprep.subr.mxu0 0.0
    %703 = vmatpush1.msra.mxu0 0.0
    %704 = vmatprep.subr.mxu0 0.0
    %705 = vmatpush1.msra.mxu0 0.0
    %706 = vmatprep.subr.mxu0 0.0
    %707 = vmatpush1.msra.mxu0 0.0
    %708 = vmatprep.subr.mxu0 0.0
    %709 = vmatpush1.msra.mxu0 0.0
    %710 = vmatprep.subr.mxu0 0.0
    %711 = vmatpush1.msra.mxu0 0.0
    %712 = vmatprep.subr.mxu0 0.0
    %713 = vmatpush1.msra.mxu0 0.0
    %714 = vmatprep.subr.mxu0 0.0
    %715 = vmatpush1.msra.mxu0 0.0
    %716 = vmatprep.subr.mxu0 0.0
    %717 = vmatpush1.msra.mxu0 0.0
    %718 = vmatprep.subr.mxu0 0.0
    %719 = vmatpush1.msra.mxu0 0.0
    %720 = vmatprep.subr.mxu0 0.0
    %721 = vmatpush1.msra.mxu0 0.0
    %722 = vmatprep.subr.mxu0 0.0
    %723 = vmatpush1.msra.mxu0 0.0
    %724 = vmatprep.subr.mxu0 0.0
    %725 = vmatpush1.msra.mxu0 0.0
    %726 = vmatprep.subr.mxu0 0.0
    %727 = vmatpush1.msra.mxu0 0.0
    %728 = vmatprep.subr.mxu0 0.0
    %729 = vmatpush1.msra.mxu0 0.0
    %730 = vmatprep.subr.mxu0 0.0
    %731 = vmatpush1.msra.mxu0 0.0
    %732 = vmatprep.subr.mxu0 0.0
    %733 = vmatpush1.msra.mxu0 0.0
    %734 = vmatprep.subr.mxu0 0.0
    %735 = vmatpush1.msra.mxu0 0.0
    %736 = vmatprep.subr.mxu0 0.0
    %737 = vmatpush1.msra.mxu0 0.0
    %738 = vmatprep.subr.mxu0 0.0
    %739 = vmatpush1.msra.mxu0 0.0
    %740 = vmatprep.subr.mxu0 0.0
    %741 = vmatpush1.msra.mxu0 0.0
    %742 = vmatprep.subr.mxu0 0.0
    %743 = vmatpush1.msra.mxu0 0.0
    %744 = vmatprep.subr.mxu0 0.0
    %745 = vmatpush1.msra.mxu0 0.0
    %746 = vmatprep.subr.mxu0 0.0
    %747 = vmatpush1.msra.mxu0 0.0
    %748 = vmatprep.mubr.f32.mxu0 0.0
    %749 = vmatmul.mubr.f32.gmra.mrb[0].mxu0 %v682
    %v750 = vpop.f32.mrb[0].mxu0
    %v751 = vadd.f32 0.0, %v750
    %v752 = vpop.f32.mrb[0].mxu0
    %753 = vdwg.mxu0
    %v755 = vrot.slane %v751, 6
    %v757 = vadd.f32 %v150, %v755
    %v758 = vxor.u32 %v757, 2147483648
    %v759 = vmul.f32 %v758, 1.442695
    %v760 = vpow.pop %v759
    %v761 = vadd.f32 %v760, 1.0
    %v762 = vrcp.pop %v761
    %v763 = vmul.f32 1.0, %v762
    %v764 = vtanh.pop %v757
    %v766 = vrot.slane %v672, 6
    %v768 = vmul.f32 %v763, %v766
    %770 = vrot.lane.b32.xlu0 %v764, 64
    %v771 = vpop.permute.xlu0 %770
    %v773 = vmul.f32 %v763, %v771
    %775 = vrot.lane.b32.xlu0 %v773, 32
    %v776 = vpop.permute.xlu0 %775
    %v778 = vadd.f32 %v768, %v776
    %v779 = vtanh.pop %v778
    %781 = vrot.lane.b32.xlu0 %v779, 64
    %v782 = vpop.permute.xlu0 %781
    %v784 = vmul.f32 %v763, %v782
    %v786 = vrot.slane %v784, 2
    %787 = vrot.lane.b32.xlu0 %v786, 32
    %v788 = vpop.permute.xlu0 %787
    %v789 = vsel %vm71, %v788, 0
    %791 = vmatprep.subr.mxu0 0.0
    %792 = vmatpush1.msra.mxu0 %v153
    %793 = vmatprep.subr.mxu0 0.0
    %794 = vmatpush1.msra.mxu0 %v154
    %795 = vmatprep.subr.mxu0 0.0
    %796 = vmatpush1.msra.mxu0 %v155
    %797 = vmatprep.subr.mxu0 0.0
    %798 = vmatpush1.msra.mxu0 %v156
    %799 = vmatprep.subr.mxu0 0.0
    %800 = vmatpush1.msra.mxu0 0.0
    %801 = vmatprep.subr.mxu0 0.0
    %802 = vmatpush1.msra.mxu0 0.0
    %803 = vmatprep.subr.mxu0 0.0
    %804 = vmatpush1.msra.mxu0 0.0
    %805 = vmatprep.subr.mxu0 0.0
    %806 = vmatpush1.msra.mxu0 0.0
    %807 = vmatprep.subr.mxu0 0.0
    %808 = vmatpush1.msra.mxu0 0.0
    %809 = vmatprep.subr.mxu0 0.0
    %810 = vmatpush1.msra.mxu0 0.0
    %811 = vmatprep.subr.mxu0 0.0
    %812 = vmatpush1.msra.mxu0 0.0
    %813 = vmatprep.subr.mxu0 0.0
    %814 = vmatpush1.msra.mxu0 0.0
    %815 = vmatprep.subr.mxu0 0.0
    %816 = vmatpush1.msra.mxu0 0.0
    %817 = vmatprep.subr.mxu0 0.0
    %818 = vmatpush1.msra.mxu0 0.0
    %819 = vmatprep.subr.mxu0 0.0
    %820 = vmatpush1.msra.mxu0 0.0
    %821 = vmatprep.subr.mxu0 0.0
    %822 = vmatpush1.msra.mxu0 0.0
    %823 = vmatprep.subr.mxu0 0.0
    %824 = vmatpush1.msra.mxu0 0.0
    %825 = vmatprep.subr.mxu0 0.0
    %826 = vmatpush1.msra.mxu0 0.0
    %827 = vmatprep.subr.mxu0 0.0
    %828 = vmatpush1.msra.mxu0 0.0
    %829 = vmatprep.subr.mxu0 0.0
    %830 = vmatpush1.msra.mxu0 0.0
    %831 = vmatprep.subr.mxu0 0.0
    %832 = vmatpush1.msra.mxu0 0.0
    %833 = vmatprep.subr.mxu0 0.0
    %834 = vmatpush1.msra.mxu0 0.0
    %835 = vmatprep.subr.mxu0 0.0
    %836 = vmatpush1.msra.mxu0 0.0
    %837 = vmatprep.subr.mxu0 0.0
    %838 = vmatpush1.msra.mxu0 0.0
    %839 = vmatprep.subr.mxu0 0.0
    %840 = vmatpush1.msra.mxu0 0.0
    %841 = vmatprep.subr.mxu0 0.0
    %842 = vmatpush1.msra.mxu0 0.0
    %843 = vmatprep.subr.mxu0 0.0
    %844 = vmatpush1.msra.mxu0 0.0
    %845 = vmatprep.subr.mxu0 0.0
    %846 = vmatpush1.msra.mxu0 0.0
    %847 = vmatprep.subr.mxu0 0.0
    %848 = vmatpush1.msra.mxu0 0.0
    %849 = vmatprep.subr.mxu0 0.0
    %850 = vmatpush1.msra.mxu0 0.0
    %851 = vmatprep.subr.mxu0 0.0
    %852 = vmatpush1.msra.mxu0 0.0
    %853 = vmatprep.subr.mxu0 0.0
    %854 = vmatpush1.msra.mxu0 0.0
    %855 = vmatprep.mubr.f32.mxu0 0.0
    %856 = vmatmul.mubr.f32.gmra.mrb[0].mxu0 %v789
    %v857 = vpop.f32.mrb[0].mxu0
    %v858 = vadd.f32 0.0, %v857
    %v859 = vpop.f32.mrb[0].mxu0
    %860 = vdwg.mxu0
    %v862 = vrot.slane %v858, 4
    %v864 = vadd.f32 %v150, %v862
    %v865 = vxor.u32 %v864, 2147483648
    %v866 = vmul.f32 %v865, 1.442695
    %v867 = vpow.pop %v866
    %v868 = vadd.f32 %v867, 1.0
    %v869 = vrcp.pop %v868
    %v870 = vmul.f32 1.0, %v869
    %v871 = vtanh.pop %v864
    %v873 = vrot.slane %v778, 6
    %v875 = vmul.f32 %v870, %v873
    %877 = vrot.lane.b32.xlu0 %v871, 64
    %v878 = vpop.permute.xlu0 %877
    %v880 = vmul.f32 %v870, %v878
    %882 = vrot.lane.b32.xlu0 %v880, 32
    %v883 = vpop.permute.xlu0 %882
    %v885 = vadd.f32 %v875, %v883
    %v886 = vtanh.pop %v885
    %888 = vrot.lane.b32.xlu0 %v886, 64
    %v889 = vpop.permute.xlu0 %888
    %v891 = vmul.f32 %v870, %v889
    %v893 = vrot.slane %v891, 4
    %894 = vrot.lane.b32.xlu0 %v893, 32
    %v895 = vpop.permute.xlu0 %894
    %v896 = vsel %vm71, %v895, 0
    %898 = vmatprep.subr.mxu0 0.0
    %899 = vmatpush1.msra.mxu0 %v153
    %900 = vmatprep.subr.mxu0 0.0
    %901 = vmatpush1.msra.mxu0 %v154
    %902 = vmatprep.subr.mxu0 0.0
    %903 = vmatpush1.msra.mxu0 %v155
    %904 = vmatprep.subr.mxu0 0.0
    %905 = vmatpush1.msra.mxu0 %v156
    %906 = vmatprep.subr.mxu0 0.0
    %907 = vmatpush1.msra.mxu0 0.0
    %908 = vmatprep.subr.mxu0 0.0
    %909 = vmatpush1.msra.mxu0 0.0
    %910 = vmatprep.subr.mxu0 0.0
    %911 = vmatpush1.msra.mxu0 0.0
    %912 = vmatprep.subr.mxu0 0.0
    %913 = vmatpush1.msra.mxu0 0.0
    %914 = vmatprep.subr.mxu0 0.0
    %915 = vmatpush1.msra.mxu0 0.0
    %916 = vmatprep.subr.mxu0 0.0
    %917 = vmatpush1.msra.mxu0 0.0
    %918 = vmatprep.subr.mxu0 0.0
    %919 = vmatpush1.msra.mxu0 0.0
    %920 = vmatprep.subr.mxu0 0.0
    %921 = vmatpush1.msra.mxu0 0.0
    %922 = vmatprep.subr.mxu0 0.0
    %923 = vmatpush1.msra.mxu0 0.0
    %924 = vmatprep.subr.mxu0 0.0
    %925 = vmatpush1.msra.mxu0 0.0
    %926 = vmatprep.subr.mxu0 0.0
    %927 = vmatpush1.msra.mxu0 0.0
    %928 = vmatprep.subr.mxu0 0.0
    %929 = vmatpush1.msra.mxu0 0.0
    %930 = vmatprep.subr.mxu0 0.0
    %931 = vmatpush1.msra.mxu0 0.0
    %932 = vmatprep.subr.mxu0 0.0
    %933 = vmatpush1.msra.mxu0 0.0
    %934 = vmatprep.subr.mxu0 0.0
    %935 = vmatpush1.msra.mxu0 0.0
    %936 = vmatprep.subr.mxu0 0.0
    %937 = vmatpush1.msra.mxu0 0.0
    %938 = vmatprep.subr.mxu0 0.0
    %939 = vmatpush1.msra.mxu0 0.0
    %940 = vmatprep.subr.mxu0 0.0
    %941 = vmatpush1.msra.mxu0 0.0
    %942 = vmatprep.subr.mxu0 0.0
    %943 = vmatpush1.msra.mxu0 0.0
    %944 = vmatprep.subr.mxu0 0.0
    %945 = vmatpush1.msra.mxu0 0.0
    %946 = vmatprep.subr.mxu0 0.0
    %947 = vmatpush1.msra.mxu0 0.0
    %948 = vmatprep.subr.mxu0 0.0
    %949 = vmatpush1.msra.mxu0 0.0
    %950 = vmatprep.subr.mxu0 0.0
    %951 = vmatpush1.msra.mxu0 0.0
    %952 = vmatprep.subr.mxu0 0.0
    %953 = vmatpush1.msra.mxu0 0.0
    %954 = vmatprep.subr.mxu0 0.0
    %955 = vmatpush1.msra.mxu0 0.0
    %956 = vmatprep.subr.mxu0 0.0
    %957 = vmatpush1.msra.mxu0 0.0
    %958 = vmatprep.subr.mxu0 0.0
    %959 = vmatpush1.msra.mxu0 0.0
    %960 = vmatprep.subr.mxu0 0.0
    %961 = vmatpush1.msra.mxu0 0.0
    %962 = vmatprep.mubr.f32.mxu0 0.0
    %963 = vmatmul.mubr.f32.gmra.mrb[0].mxu0 %v896
    %v964 = vpop.f32.mrb[0].mxu0
    %v965 = vadd.f32 0.0, %v964
    %v966 = vpop.f32.mrb[0].mxu0
    %967 = vdwg.mxu0
    %v969 = vrot.slane %v965, 2
    %v971 = vadd.f32 %v150, %v969
    %v972 = vxor.u32 %v971, 2147483648
    %v973 = vmul.f32 %v972, 1.442695
    %v974 = vpow.pop %v973
    %v975 = vadd.f32 %v974, 1.0
    %v976 = vrcp.pop %v975
    %v977 = vmul.f32 1.0, %v976
    %v978 = vtanh.pop %v971
    %v980 = vrot.slane %v885, 6
    %v982 = vmul.f32 %v977, %v980
    %984 = vrot.lane.b32.xlu0 %v978, 64
    %v985 = vpop.permute.xlu0 %984
    %v987 = vmul.f32 %v977, %v985
    %989 = vrot.lane.b32.xlu0 %v987, 32
    %v990 = vpop.permute.xlu0 %989
    %v992 = vadd.f32 %v982, %v990
    %v993 = vtanh.pop %v992
    %995 = vrot.lane.b32.xlu0 %v993, 64
    %v996 = vpop.permute.xlu0 %995
    %v998 = vmul.f32 %v977, %v996
    %v999 = vld [vmem:[#allocation2 + $0xe] sm:$0x3]
    %v1000 = vld [vmem:[#allocation5] sm:$0xff]
    %v1001 = vld [vmem:[#allocation5 + $0x8] sm:$0xff]
    %v1002 = vld [vmem:[#allocation5 + $0x10] sm:$0xff]
    %v1003 = vld [vmem:[#allocation5 + $0x18] sm:$0xff]
    %v1004 = vld [vmem:[%s5] sm:$0x1]
    %v1006 = vlaneseq
    %v1007 = vshrl.u32 %v1006, 7
    %v1008 = vsub.s32 0, %v1007
    %v1009 = vrot.slane %v1004, %v1008
    %v1012 = vsel %vm71, %v999, 0
    %1014 = vmatprep.subr.mxu0 0.0
    %1015 = vmatpush1.msra.mxu0 %v1000
    %1016 = vmatprep.subr.mxu0 0.0
    %1017 = vmatpush1.msra.mxu0 %v1001
    %1018 = vmatprep.subr.mxu0 0.0
    %1019 = vmatpush1.msra.mxu0 %v1002
    %1020 = vmatprep.subr.mxu0 0.0
    %1021 = vmatpush1.msra.mxu0 %v1003
    %1022 = vmatprep.subr.mxu0 0.0
    %1023 = vmatpush1.msra.mxu0 0.0
    %1024 = vmatprep.subr.mxu0 0.0
    %1025 = vmatpush1.msra.mxu0 0.0
    %1026 = vmatprep.subr.mxu0 0.0
    %1027 = vmatpush1.msra.mxu0 0.0
    %1028 = vmatprep.subr.mxu0 0.0
    %1029 = vmatpush1.msra.mxu0 0.0
    %1030 = vmatprep.subr.mxu0 0.0
    %1031 = vmatpush1.msra.mxu0 0.0
    %1032 = vmatprep.subr.mxu0 0.0
    %1033 = vmatpush1.msra.mxu0 0.0
    %1034 = vmatprep.subr.mxu0 0.0
    %1035 = vmatpush1.msra.mxu0 0.0
    %1036 = vmatprep.subr.mxu0 0.0
    %1037 = vmatpush1.msra.mxu0 0.0
    %1038 = vmatprep.subr.mxu0 0.0
    %1039 = vmatpush1.msra.mxu0 0.0
    %1040 = vmatprep.subr.mxu0 0.0
    %1041 = vmatpush1.msra.mxu0 0.0
    %1042 = vmatprep.subr.mxu0 0.0
    %1043 = vmatpush1.msra.mxu0 0.0
    %1044 = vmatprep.subr.mxu0 0.0
    %1045 = vmatpush1.msra.mxu0 0.0
    %1046 = vmatprep.subr.mxu0 0.0
    %1047 = vmatpush1.msra.mxu0 0.0
    %1048 = vmatprep.subr.mxu0 0.0
    %1049 = vmatpush1.msra.mxu0 0.0
    %1050 = vmatprep.subr.mxu0 0.0
    %1051 = vmatpush1.msra.mxu0 0.0
    %1052 = vmatprep.subr.mxu0 0.0
    %1053 = vmatpush1.msra.mxu0 0.0
    %1054 = vmatprep.subr.mxu0 0.0
    %1055 = vmatpush1.msra.mxu0 0.0
    %1056 = vmatprep.subr.mxu0 0.0
    %1057 = vmatpush1.msra.mxu0 0.0
    %1058 = vmatprep.subr.mxu0 0.0
    %1059 = vmatpush1.msra.mxu0 0.0
    %1060 = vmatprep.subr.mxu0 0.0
    %1061 = vmatpush1.msra.mxu0 0.0
    %1062 = vmatprep.subr.mxu0 0.0
    %1063 = vmatpush1.msra.mxu0 0.0
    %1064 = vmatprep.subr.mxu0 0.0
    %1065 = vmatpush1.msra.mxu0 0.0
    %1066 = vmatprep.subr.mxu0 0.0
    %1067 = vmatpush1.msra.mxu0 0.0
    %1068 = vmatprep.subr.mxu0 0.0
    %1069 = vmatpush1.msra.mxu0 0.0
    %1070 = vmatprep.subr.mxu0 0.0
    %1071 = vmatpush1.msra.mxu0 0.0
    %1072 = vmatprep.subr.mxu0 0.0
    %1073 = vmatpush1.msra.mxu0 0.0
    %1074 = vmatprep.subr.mxu0 0.0
    %1075 = vmatpush1.msra.mxu0 0.0
    %1076 = vmatprep.subr.mxu0 0.0
    %1077 = vmatpush1.msra.mxu0 0.0
    %1078 = vmatprep.mubr.f32.mxu0 0.0
    %1079 = vmatmul.mubr.f32.gmra.mrb[0].mxu0 %v1012
    %v1080 = vpop.f32.mrb[0].mxu0
    %v1081 = vadd.f32 %v1009, %v1080
    %v1082 = vpop.f32.mrb[0].mxu0
    %1083 = vdwg.mxu0
    %v1084 = vxor.u32 %v1081, 2147483648
    %v1085 = vmul.f32 %v1084, 1.442695
    %v1086 = vpow.pop %v1085
    %v1087 = vadd.f32 %v1086, 1.0
    %v1088 = vrcp.pop %v1087
    %v1089 = vmul.f32 1.0, %v1088
    %v1090 = vtanh.pop %v1081
    %v1091 = vmul.f32 %v1089, 0.0
    %1093 = vrot.lane.b32.xlu0 %v1090, 64
    %v1094 = vpop.permute.xlu0 %1093
    %v1096 = vmul.f32 %v1089, %v1094
    %1098 = vrot.lane.b32.xlu0 %v1096, 32
    %v1099 = vpop.permute.xlu0 %1098
    %v1101 = vadd.f32 %v1091, %v1099
    %v1102 = vtanh.pop %v1101
    %1104 = vrot.lane.b32.xlu0 %v1102, 64
    %v1105 = vpop.permute.xlu0 %1104
    %v1107 = vmul.f32 %v1089, %v1105
    %v1108 = vld [vmem:[%s6] sm:$0xff]
    %v1109 = vld [vmem:[%s6 + $0x8] sm:$0xff]
    %v1110 = vld [vmem:[%s6 + $0x10] sm:$0xff]
    %v1111 = vld [vmem:[%s6 + $0x18] sm:$0xff]
    %v1112 = vld [vmem:[%s6 + $0x20] sm:$0xff]
    %v1113 = vld [vmem:[%s6 + $0x28] sm:$0xff]
    %v1114 = vld [vmem:[%s6 + $0x30] sm:$0xff]
    %v1115 = vld [vmem:[%s6 + $0x38] sm:$0xff]
    %1117 = vrot.lane.b32.xlu0 %v1107, 32
    %v1118 = vpop.permute.xlu0 %1117
    %v1119 = vsel %vm71, %v1118, 0
    %1121 = vmatprep.subr.mxu0 0.0
    %1122 = vmatpush1.msra.mxu0 %v1112
    %1123 = vmatprep.subr.mxu0 0.0
    %1124 = vmatpush1.msra.mxu0 %v1113
    %1125 = vmatprep.subr.mxu0 0.0
    %1126 = vmatpush1.msra.mxu0 %v1114
    %1127 = vmatprep.subr.mxu0 0.0
    %1128 = vmatpush1.msra.mxu0 %v1115
    %1129 = vmatprep.subr.mxu0 0.0
    %1130 = vmatpush1.msra.mxu0 0.0
    %1131 = vmatprep.subr.mxu0 0.0
    %1132 = vmatpush1.msra.mxu0 0.0
    %1133 = vmatprep.subr.mxu0 0.0
    %1134 = vmatpush1.msra.mxu0 0.0
    %1135 = vmatprep.subr.mxu0 0.0
    %1136 = vmatpush1.msra.mxu0 0.0
    %1137 = vmatprep.subr.mxu0 0.0
    %1138 = vmatpush1.msra.mxu0 0.0
    %1139 = vmatprep.subr.mxu0 0.0
    %1140 = vmatpush1.msra.mxu0 0.0
    %1141 = vmatprep.subr.mxu0 0.0
    %1142 = vmatpush1.msra.mxu0 0.0
    %1143 = vmatprep.subr.mxu0 0.0
    %1144 = vmatpush1.msra.mxu0 0.0
    %1145 = vmatprep.subr.mxu0 0.0
    %1146 = vmatpush1.msra.mxu0 0.0
    %1147 = vmatprep.subr.mxu0 0.0
    %1148 = vmatpush1.msra.mxu0 0.0
    %1149 = vmatprep.subr.mxu0 0.0
    %1150 = vmatpush1.msra.mxu0 0.0
    %1151 = vmatprep.subr.mxu0 0.0
    %1152 = vmatpush1.msra.mxu0 0.0
    %1153 = vmatprep.subr.mxu0 0.0
    %1154 = vmatpush1.msra.mxu0 0.0
    %1155 = vmatprep.subr.mxu0 0.0
    %1156 = vmatpush1.msra.mxu0 0.0
    %1157 = vmatprep.subr.mxu0 0.0
    %1158 = vmatpush1.msra.mxu0 0.0
    %1159 = vmatprep.subr.mxu0 0.0
    %1160 = vmatpush1.msra.mxu0 0.0
    %1161 = vmatprep.subr.mxu0 0.0
    %1162 = vmatpush1.msra.mxu0 0.0
    %1163 = vmatprep.subr.mxu0 0.0
    %1164 = vmatpush1.msra.mxu0 0.0
    %1165 = vmatprep.subr.mxu0 0.0
    %1166 = vmatpush1.msra.mxu0 0.0
    %1167 = vmatprep.subr.mxu0 0.0
    %1168 = vmatpush1.msra.mxu0 0.0
    %1169 = vmatprep.subr.mxu0 0.0
    %1170 = vmatpush1.msra.mxu0 0.0
    %1171 = vmatprep.subr.mxu0 0.0
    %1172 = vmatpush1.msra.mxu0 0.0
    %1173 = vmatprep.subr.mxu0 0.0
    %1174 = vmatpush1.msra.mxu0 0.0
    %1175 = vmatprep.subr.mxu0 0.0
    %1176 = vmatpush1.msra.mxu0 0.0
    %1177 = vmatprep.subr.mxu0 0.0
    %1178 = vmatpush1.msra.mxu0 0.0
    %1179 = vmatprep.subr.mxu0 0.0
    %1180 = vmatpush1.msra.mxu0 0.0
    %1181 = vmatprep.subr.mxu0 0.0
    %1182 = vmatpush1.msra.mxu0 0.0
    %1183 = vmatprep.subr.mxu0 0.0
    %1184 = vmatpush1.msra.mxu0 0.0
    %1185 = vmatprep.mubr.f32.mxu0 0.0
    %1186 = vmatmul.mubr.f32.gmra.mrb[0].mxu0 %v1119
    %v1187 = vpop.f32.mrb[0].mxu0
    %v1188 = vadd.f32 0.0, %v1187
    %v1189 = vpop.f32.mrb[0].mxu0
    %1190 = vdwg.mxu0
    %v1192 = vrot.slane %v998, 6
    %1193 = vrot.lane.b32.xlu0 %v1192, 32
    %v1194 = vpop.permute.xlu0 %1193
    %v1195 = vsel %vm71, %v1194, 0
    %1197 = vmatprep.subr.mxu0 0.0
    %1198 = vmatpush1.msra.mxu0 %v1108
    %1199 = vmatprep.subr.mxu0 0.0
    %1200 = vmatpush1.msra.mxu0 %v1109
    %1201 = vmatprep.subr.mxu0 0.0
    %1202 = vmatpush1.msra.mxu0 %v1110
    %1203 = vmatprep.subr.mxu0 0.0
    %1204 = vmatpush1.msra.mxu0 %v1111
    %1205 = vmatprep.subr.mxu0 0.0
    %1206 = vmatpush1.msra.mxu0 0.0
    %1207 = vmatprep.subr.mxu0 0.0
    %1208 = vmatpush1.msra.mxu0 0.0
    %1209 = vmatprep.subr.mxu0 0.0
    %1210 = vmatpush1.msra.mxu0 0.0
    %1211 = vmatprep.subr.mxu0 0.0
    %1212 = vmatpush1.msra.mxu0 0.0
    %1213 = vmatprep.subr.mxu0 0.0
    %1214 = vmatpush1.msra.mxu0 0.0
    %1215 = vmatprep.subr.mxu0 0.0
    %1216 = vmatpush1.msra.mxu0 0.0
    %1217 = vmatprep.subr.mxu0 0.0
    %1218 = vmatpush1.msra.mxu0 0.0
    %1219 = vmatprep.subr.mxu0 0.0
    %1220 = vmatpush1.msra.mxu0 0.0
    %1221 = vmatprep.subr.mxu0 0.0
    %1222 = vmatpush1.msra.mxu0 0.0
    %1223 = vmatprep.subr.mxu0 0.0
    %1224 = vmatpush1.msra.mxu0 0.0
    %1225 = vmatprep.subr.mxu0 0.0
    %1226 = vmatpush1.msra.mxu0 0.0
    %1227 = vmatprep.subr.mxu0 0.0
    %1228 = vmatpush1.msra.mxu0 0.0
    %1229 = vmatprep.subr.mxu0 0.0
    %1230 = vmatpush1.msra.mxu0 0.0
    %1231 = vmatprep.subr.mxu0 0.0
    %1232 = vmatpush1.msra.mxu0 0.0
    %1233 = vmatprep.subr.mxu0 0.0
    %1234 = vmatpush1.msra.mxu0 0.0
    %1235 = vmatprep.subr.mxu0 0.0
    %1236 = vmatpush1.msra.mxu0 0.0
    %1237 = vmatprep.subr.mxu0 0.0
    %1238 = vmatpush1.msra.mxu0 0.0
    %1239 = vmatprep.subr.mxu0 0.0
    %1240 = vmatpush1.msra.mxu0 0.0
    %1241 = vmatprep.subr.mxu0 0.0
    %1242 = vmatpush1.msra.mxu0 0.0
    %1243 = vmatprep.subr.mxu0 0.0
    %1244 = vmatpush1.msra.mxu0 0.0
    %1245 = vmatprep.subr.mxu0 0.0
    %1246 = vmatpush1.msra.mxu0 0.0
    %1247 = vmatprep.subr.mxu0 0.0
    %1248 = vmatpush1.msra.mxu0 0.0
    %1249 = vmatprep.subr.mxu0 0.0
    %1250 = vmatpush1.msra.mxu0 0.0
    %1251 = vmatprep.subr.mxu0 0.0
    %1252 = vmatpush1.msra.mxu0 0.0
    %1253 = vmatprep.subr.mxu0 0.0
    %1254 = vmatpush1.msra.mxu0 0.0
    %1255 = vmatprep.subr.mxu0 0.0
    %1256 = vmatpush1.msra.mxu0 0.0
    %1257 = vmatprep.subr.mxu0 0.0
    %1258 = vmatpush1.msra.mxu0 0.0
    %1259 = vmatprep.subr.mxu0 0.0
    %1260 = vmatpush1.msra.mxu0 0.0
    %1261 = vmatprep.mubr.f32.mxu0 0.0
    %1262 = vmatmul.mubr.f32.gmra.mrb[0].mxu0 %v1195
    %v1263 = vpop.f32.mrb[0].mxu0
    %v1264 = vadd.f32 %v1188, %v1263
    %v1265 = vpop.f32.mrb[0].mxu0
    %1266 = vdwg.mxu0
    %v1267 = vld [vmem:[%s7] sm:$0x1]
    %v1269 = vlaneseq
    %v1270 = vshrl.u32 %v1269, 7
    %v1271 = vsub.s32 0, %v1270
    %v1272 = vrot.slane %v1267, %v1271
    %v1274 = vadd.f32 %v1264, %v1272
    %vm1275 = vcmask 58368
    %1276 = vst.msk [vmem:[#allocation7] sm:$0x3] %vm1275, %v1274
    // Predicated region
    $region42: #{tpu_custom_call.1} parent=1 // pred_check
      _
    $region43: #{tpu_custom_call.1} parent=1 // pred_check_branch
      %1278 = sbr.rel (0) target = $region45
    $region44: #{tpu_custom_call.1} parent=1 // pred_region
      %s1280 = ssub.s32 32, 32
      %1281 = vsyncadd [#allocation4], %s1280
      %s1283 = sshll.u32 [#allocation7], 4
      %s1284 = int_to_ptr.vmem [resolvable:$true] %s1283
      %1286 = dma.vmem_to_hbm [thread:$0]  %s1284, 32, %s8, [#allocation4]
    $region45: #{tpu_custom_call.1} parent=1 // pred_fallthru
      _
    // Predicated region
    $region46: #{tpu_custom_call.1} parent=1 // pred_check
      _
    $region47: #{tpu_custom_call.1} parent=1 // pred_check_branch
      %1288 = sbr.rel (0) target = $region49
    $region48: #{tpu_custom_call.1} parent=1 // pred_region
      %1289 = dma.done [#allocation4], 32
    $region49: #{tpu_custom_call.1} parent=1 // pred_fallthru
      _
    %1290 = vsyncpa [#allocation3], 1
    %1291 = vsyncpa [#allocation6], 1
    %1292 = vsyncpa [#allocation4], 1

</llo_original>
